<compile_context>
chip_gen: v5e
topology: v5e:2x2
jax: 0.10.0
libtpu: 0.0.40
codegen_flags: <defaults>
</compile_context>

<pallas_src>
import jax
import jax.numpy as jnp
from jax.experimental import pallas as pl
from jax.experimental.pallas import tpu as pltpu

EPSILON = 1e-8   # matches the PyTorch module's EPSILON
BN_EPS = 1e-5    # nn.BatchNorm1d default eps
K = 3            # pointops.nearestneighbor uses 3 nearest neighbors
COORD_PAD = 8    # augmented coordinate width (3 coords + |p|^2 + 1 + padding)
FAR = 1e12       # squared-distance sentinel for padded coarse points (never selected)


def _transition_up_kernel(p2a_ref, p1a_ref, x1_ref, x2_ref,
                          w1_ref, s1_ref, b1_ref,
                          w2_ref, s2_ref, b2_ref,
                          y_ref):
    f32 = jnp.float32
    bf16 = jnp.bfloat16

    # ---- linear1 (1x1 conv + folded BN + ReLU) on the resident coarse features ----
    # channels-first: (Cout, Cin) @ (Cin, N1) -> (Cout, N1)
    f1 = jnp.dot(w1_ref[...], x1_ref[0], preferred_element_type=f32)
    f1 = jnp.maximum(f1 * s1_ref[...] + b1_ref[...], 0.0)

    # ---- linear2 (1x1 conv + folded BN + ReLU) on the streamed skip tile ----
    # (Cout, Cskip) @ (Cskip, TN2) -> (Cout, TN2)
    f2 = jnp.dot(w2_ref[...], x2_ref[0], preferred_element_type=f32)
    f2 = jnp.maximum(f2 * s2_ref[...] + b2_ref[...], 0.0)

    # ---- pairwise squared distances in ONE f32 MXU matmul on augmented coordinates ----
    # (TN2, 8) @ (8, N1) -> (TN2, N1) ;  clamp cancellation negatives before sqrt.
    d = jnp.dot(p2a_ref[0], p1a_ref[0], preferred_element_type=f32)
    d = jnp.maximum(d, 0.0)

    n2t, n1 = d.shape
    col = jax.lax.broadcasted_iota(jnp.int32, (n2t, n1), 1).astype(f32)
    big = jnp.float32(1e30)
    dcur = d
    wmat = jnp.zeros((n2t, n1), f32)
    rsum = jnp.zeros((n2t, 1), f32)
    for _ in range(K):
        dmin = jnp.min(dcur, axis=1, keepdims=True)                        # (TN2,1) nearest sq-dist
        # first-occurrence argmin (matches pointops / top_k ordering up to exact ties)
        idx_k = jnp.min(jnp.where(dcur <= dmin, col, big), axis=1, keepdims=True)
        sel = col == idx_k                                                 # (TN2,N1) one mask, reused
        # pointops.nearestneighbor returns sqrt of the squared distance
        recip = pl.reciprocal(jnp.sqrt(dmin) + EPSILON, approx=True)       # EUP slot, ~free
        rsum = rsum + recip
        wmat = wmat + jnp.where(sel, recip, 0.0)
        dcur = jnp.where(sel, big, dcur)                                   # mask out selected column
    wmat = wmat * (1.0 / rsum)                                             # normalized weights

    # ---- interpolation: weighted gather of coarse features == bf16 matmul on the MXU ----
    # (Cout, N1) . (TN2, N1)^T -> (Cout, TN2)
    up = jax.lax.dot_general(
        f1.astype(bf16), wmat.astype(bf16),
        (((1,), (1,)), ((), ())), preferred_element_type=f32)

    y_ref[0] = (f2 + up).astype(y_ref.dtype)


def _round_up(x, m):
    return (x + m - 1) // m * m


def _augment_p2(p2, n2_pad):
    """(B, N2, 3) -> (B, N2pad, 8) with rows [-2x, -2y, -2z, 1, |p|^2, 0, 0, 0]."""
    B, N2, _ = p2.shape
    sq = jnp.sum(p2 * p2, axis=-1, keepdims=True)
    ones = jnp.ones_like(sq)
    zeros = jnp.zeros((B, N2, 3), p2.dtype)
    aug = jnp.concatenate([-2.0 * p2, ones, sq, zeros], axis=-1)
    if n2_pad > N2:
        aug = jnp.pad(aug, ((0, 0), (0, n2_pad - N2), (0, 0)))
    return aug


def _augment_p1(p1, n1_pad):
    """(B, N1, 3) -> (B, 8, N1pad) with columns [x, y, z, |p|^2, 1, 0, 0, 0]^T.

    Padded columns carry a huge squared-norm sentinel so they are never among the 3 nearest.
    """
    B, N1, _ = p1.shape
    sq = jnp.sum(p1 * p1, axis=-1, keepdims=True)
    ones = jnp.ones_like(sq)
    zeros = jnp.zeros((B, N1, 3), p1.dtype)
    aug = jnp.concatenate([p1, sq, ones, zeros], axis=-1)          # (B, N1, 8)
    if n1_pad > N1:
        far = jnp.zeros((B, n1_pad - N1, 8), p1.dtype).at[:, :, 3].set(FAR)
        aug = jnp.concatenate([aug, far], axis=1)
    return jnp.transpose(aug, (0, 2, 1))                           # (B, 8, N1pad) -- tiny array


def transition_up_forward(p1, x1, p2, x2, params):
    """p1:(B,N1,3), x1:(B,Cin,N1), p2:(B,N2,3), x2:(B,Cskip,N2) -> [p2, y:(B,Cout,N2)]

    params = (w1:(Cout,Cin), s1:(Cout,1), b1:(Cout,1), w2:(Cout,Cskip), s2:(Cout,1), b2:(Cout,1))
    (PyTorch-native Conv1d weight layout; BN folded into scale/bias.)
    """
    w1, s1, b1, w2, s2, b2 = params
    B, N1, _ = p1.shape
    _, N2, _ = p2.shape
    Cin = x1.shape[1]
    Cskip = x2.shape[1]
    Cout = w1.shape[0]

    n1_pad = _round_up(N1, 128)
    # N2 tile: big enough to amortize per-grid-step overhead, small enough that the ~4 live
    # (TN2, N1) f32 temporaries stay under ~16 MiB (keeps the whole kernel v7x-safe).
    tn2 = max(128, min(512, (16 * 1024 * 1024 // (16 * n1_pad)) // 128 * 128))
    tn2 = min(tn2, _round_up(N2, 128))
    n2_pad = _round_up(N2, tn2)

    # ---- glue: only coordinate-sized arrays get reshaped; no feature transposes ----
    p2a = _augment_p2(p2, n2_pad)                                   # (B, N2pad, 8)  f32
    p1a = _augment_p1(p1, n1_pad)                                   # (B, 8, N1pad)  f32
    x1p = x1 if N1 == n1_pad else jnp.pad(x1, ((0, 0), (0, 0), (0, n1_pad - N1)))
    x2p = x2 if N2 == n2_pad else jnp.pad(x2, ((0, 0), (0, 0), (0, n2_pad - N2)))
    x1p = x1p.astype(jnp.bfloat16)                                  # (B, Cin,  N1pad)
    x2p = x2p.astype(jnp.bfloat16)                                  # (B, Cskip, N2pad)
    w1b = w1.astype(jnp.bfloat16)
    w2b = w2.astype(jnp.bfloat16)

    grid = (B, n2_pad // tn2)

    # Rough per-step VMEM estimate (double-buffered streamed tiles + resident blocks + temps);
    # only raise the scoped-VMEM limit when we actually need more than the default.
    est = (2 * (tn2 * 8 * 4 + Cskip * tn2 * 2 + Cout * tn2 * 4)
           + 2 * (8 * n1_pad * 4 + Cin * n1_pad * 2)
           + 6 * tn2 * n1_pad * 4
           + Cout * n1_pad * 4 + 2 * Cout * tn2 * 4)
    vmem_limit = None if est < 24 * 1024 * 1024 else min(int(est * 3 // 2), 100 * 1024 * 1024)

    out = pl.pallas_call(
        _transition_up_kernel,
        out_shape=jax.ShapeDtypeStruct((B, Cout, n2_pad), jnp.float32),
        grid_spec=pltpu.PrefetchScalarGridSpec(
            num_scalar_prefetch=0,
            grid=grid,
            in_specs=[
                pl.BlockSpec((1, tn2, COORD_PAD), lambda b, j: (b, j, 0)),    # p2 (augmented), streamed
                pl.BlockSpec((1, COORD_PAD, n1_pad), lambda b, j: (b, 0, 0)),  # p1 (augmented^T), resident
                pl.BlockSpec((1, Cin, n1_pad), lambda b, j: (b, 0, 0)),        # x1 (channels-first), resident
                pl.BlockSpec((1, Cskip, tn2), lambda b, j: (b, 0, j)),         # x2 tile (channels-first)
                pl.BlockSpec((Cout, Cin), lambda b, j: (0, 0)),                # W1
                pl.BlockSpec((Cout, 1), lambda b, j: (0, 0)),                  # BN1 scale
                pl.BlockSpec((Cout, 1), lambda b, j: (0, 0)),                  # BN1 bias
                pl.BlockSpec((Cout, Cskip), lambda b, j: (0, 0)),              # W2
                pl.BlockSpec((Cout, 1), lambda b, j: (0, 0)),                  # BN2 scale
                pl.BlockSpec((Cout, 1), lambda b, j: (0, 0)),                  # BN2 bias
            ],
            out_specs=pl.BlockSpec((1, Cout, tn2), lambda b, j: (b, 0, j)),    # lane-dense in TN2
        ),
        compiler_params=pltpu.CompilerParams(
            dimension_semantics=("parallel", "parallel"),
            vmem_limit_bytes=vmem_limit),
    )(p2a, p1a, x1p, x2p, w1b, s1, b1, w2b, s2, b2)

    y = out[:, :, :N2] if n2_pad != N2 else out                     # already PyTorch (B, Cout, N2)
    return [p2, y]


def reference_forward(p1, x1, p2, x2, params):
    """Pure-JAX f32 reference with identical semantics (for verification)."""
    w1, s1, b1, w2, s2, b2 = params
    f1 = jnp.maximum(jnp.einsum('oc,bcn->bon', w1, x1) * s1 + b1, 0.0)   # (B,Cout,N1)
    f2 = jnp.maximum(jnp.einsum('oc,bcn->bon', w2, x2) * s2 + b2, 0.0)   # (B,Cout,N2)
    d = jnp.sum((p2[:, :, None, :] - p1[:, None, :, :]) ** 2, axis=-1)   # (B,N2,N1)
    neg_d, idx = jax.lax.top_k(-d, K)
    dist = jnp.sqrt(jnp.maximum(-neg_d, 0.0))
    recip = 1.0 / (dist + EPSILON)
    weight = recip / jnp.sum(recip, axis=-1, keepdims=True)              # (B,N2,K)
    gathered = jax.vmap(lambda f, i: f[:, i])(f1, idx)                   # (B,Cout,N2,K)
    up = jnp.sum(weight[:, None, :, :] * gathered, axis=-1)              # (B,Cout,N2)
    return [p2, f2 + up]


if __name__ == "__main__":
    B, N1, N2 = 2, 8, 16
    Cin, Cskip, Cout = 16, 8, 16

    keys = jax.random.split(jax.random.PRNGKey(0), 14)
    p1 = jax.random.normal(keys[0], (B, N1, 3), jnp.float32)
    p2 = jax.random.normal(keys[1], (B, N2, 3), jnp.float32)
    x1 = jax.random.normal(keys[2], (B, Cin, N1), jnp.float32)
    x2 = jax.random.normal(keys[3], (B, Cskip, N2), jnp.float32)

    # Conv1d(kernel_size=1, bias=False) weights in PyTorch-native (Cout, Cin) layout.
    w1 = 0.1 * jax.random.normal(keys[4], (Cout, Cin), jnp.float32)
    w2 = 0.1 * jax.random.normal(keys[5], (Cout, Cskip), jnp.float32)

    # BatchNorm1d params (eval mode) -> folded per-channel scale/bias, shaped (Cout, 1).
    def bn_fold(kg, kb, km, kv):
        gamma = 1.0 + 0.1 * jax.random.normal(kg, (Cout,), jnp.float32)
        beta = 0.1 * jax.random.normal(kb, (Cout,), jnp.float32)
        mean = 0.05 * jax.random.normal(km, (Cout,), jnp.float32)
        var = 1.0 + 0.1 * jnp.abs(jax.random.normal(kv, (Cout,), jnp.float32))
        scale = gamma / jnp.sqrt(var + BN_EPS)
        bias = beta - mean * scale
        return scale.reshape(Cout, 1), bias.reshape(Cout, 1)

    s1, b1 = bn_fold(keys[6], keys[7], keys[8], keys[9])
    s2, b2 = bn_fold(keys[10], keys[11], keys[12], keys[13])
    params = (w1, s1, b1, w2, s2, b2)

    p2_out, y = transition_up_forward(p1, x1, p2, x2, params)
    y = jax.block_until_ready(y)

    _, y_ref = reference_forward(p1, x1, p2, x2, params)
    assert y.shape == (B, Cout, N2)
    # Tolerance covers bf16 MXU operands + EUP approximate reciprocal (f32 reference).
    assert jnp.allclose(y, y_ref, atol=3e-2, rtol=3e-2), "mismatch vs pure-JAX reference"

    print("KERNEL_OK")
</pallas_src>

<mosaic_0001>
module attributes {stable_mosaic.version = 11 : i64} {
  func.func @_transition_up_kernel(%arg0: i32, %arg1: i32, %arg2: memref<1x128x8xf32, #tpu.memory_space<vmem>>, %arg3: memref<1x8x128xf32, #tpu.memory_space<vmem>>, %arg4: memref<1x16x128xbf16, #tpu.memory_space<vmem>>, %arg5: memref<1x8x128xbf16, #tpu.memory_space<vmem>>, %arg6: memref<16x16xbf16, #tpu.memory_space<vmem>>, %arg7: memref<16x1xf32, #tpu.memory_space<vmem>>, %arg8: memref<16x1xf32, #tpu.memory_space<vmem>>, %arg9: memref<16x8xbf16, #tpu.memory_space<vmem>>, %arg10: memref<16x1xf32, #tpu.memory_space<vmem>>, %arg11: memref<16x1xf32, #tpu.memory_space<vmem>>, %arg12: memref<1x16x128xf32, #tpu.memory_space<vmem>>) attributes {dimension_semantics = [#tpu.dimension_semantics<parallel>, #tpu.dimension_semantics<parallel>], iteration_bounds = array<i64: 2, 1>, scalar_prefetch = 0 : i64, scratch_operands = 0 : i64, tpu.core_type = #tpu.core_type<tc>, window_params = [{transform_indices = @transform_0, window_bounds = array<i64: 1, 128, 8>}, {transform_indices = @transform_1, window_bounds = array<i64: 1, 8, 128>}, {transform_indices = @transform_2, window_bounds = array<i64: 1, 16, 128>}, {transform_indices = @transform_3, window_bounds = array<i64: 1, 8, 128>}, {pipeline_mode = #tpu.pipeline_mode<synchronous>, transform_indices = @transform_4, window_bounds = array<i64: 16, 16>}, {pipeline_mode = #tpu.pipeline_mode<synchronous>, transform_indices = @transform_5, window_bounds = array<i64: 16, 1>}, {pipeline_mode = #tpu.pipeline_mode<synchronous>, transform_indices = @transform_6, window_bounds = array<i64: 16, 1>}, {pipeline_mode = #tpu.pipeline_mode<synchronous>, transform_indices = @transform_7, window_bounds = array<i64: 16, 8>}, {pipeline_mode = #tpu.pipeline_mode<synchronous>, transform_indices = @transform_8, window_bounds = array<i64: 16, 1>}, {pipeline_mode = #tpu.pipeline_mode<synchronous>, transform_indices = @transform_9, window_bounds = array<i64: 16, 1>}, {transform_indices = @transform_10, window_bounds = array<i64: 1, 16, 128>}]} {
    %c0 = arith.constant 0 : index
    %c0_0 = arith.constant 0 : index
    %0 = vector.load %arg6[%c0, %c0_0] : memref<16x16xbf16, #tpu.memory_space<vmem>>, vector<16x16xbf16>
    %c0_1 = arith.constant 0 : index
    %c0_2 = arith.constant 0 : index
    %c0_3 = arith.constant 0 : index
    %1 = vector.load %arg4[%c0_1, %c0_2, %c0_3] : memref<1x16x128xbf16, #tpu.memory_space<vmem>>, vector<1x16x128xbf16>
    %2 = vector.shape_cast %1 : vector<1x16x128xbf16> to vector<16x128xbf16>
    %cst = arith.constant dense<0.000000e+00> : vector<16x128xf32>
    %3 = tpu.matmul %0, %2, %cst {dimension_numbers = #tpu.dot_dimension_numbers<[1], [0], [0], [1], [0, 0, 1, 1], [], []>} : vector<16x16xbf16>, vector<16x128xbf16>, vector<16x128xf32> -> vector<16x128xf32>
    %c0_4 = arith.constant 0 : index
    %c0_5 = arith.constant 0 : index
    %4 = vector.load %arg7[%c0_4, %c0_5] : memref<16x1xf32, #tpu.memory_space<vmem>>, vector<16x1xf32>
    %5 = vector.broadcast %4 : vector<16x1xf32> to vector<16x128xf32>
    %6 = arith.mulf %3, %5 : vector<16x128xf32>
    %c0_6 = arith.constant 0 : index
    %c0_7 = arith.constant 0 : index
    %7 = vector.load %arg8[%c0_6, %c0_7] : memref<16x1xf32, #tpu.memory_space<vmem>>, vector<16x1xf32>
    %8 = vector.broadcast %7 : vector<16x1xf32> to vector<16x128xf32>
    %9 = arith.addf %6, %8 : vector<16x128xf32>
    %cst_8 = arith.constant 0.000000e+00 : f32
    %10 = vector.broadcast %cst_8 : f32 to vector<16x128xf32>
    %11 = arith.maximumf %9, %10 : vector<16x128xf32>
    %c0_9 = arith.constant 0 : index
    %c0_10 = arith.constant 0 : index
    %12 = vector.load %arg9[%c0_9, %c0_10] : memref<16x8xbf16, #tpu.memory_space<vmem>>, vector<16x8xbf16>
    %c0_11 = arith.constant 0 : index
    %c0_12 = arith.constant 0 : index
    %c0_13 = arith.constant 0 : index
    %13 = vector.load %arg5[%c0_11, %c0_12, %c0_13] : memref<1x8x128xbf16, #tpu.memory_space<vmem>>, vector<1x8x128xbf16>
    %14 = vector.shape_cast %13 : vector<1x8x128xbf16> to vector<8x128xbf16>
    %cst_14 = arith.constant dense<0.000000e+00> : vector<16x128xf32>
    %15 = tpu.matmul %12, %14, %cst_14 {dimension_numbers = #tpu.dot_dimension_numbers<[1], [0], [0], [1], [0, 0, 1, 1], [], []>} : vector<16x8xbf16>, vector<8x128xbf16>, vector<16x128xf32> -> vector<16x128xf32>
    %c0_15 = arith.constant 0 : index
    %c0_16 = arith.constant 0 : index
    %16 = vector.load %arg10[%c0_15, %c0_16] : memref<16x1xf32, #tpu.memory_space<vmem>>, vector<16x1xf32>
    %17 = vector.broadcast %16 : vector<16x1xf32> to vector<16x128xf32>
    %18 = arith.mulf %15, %17 : vector<16x128xf32>
    %c0_17 = arith.constant 0 : index
    %c0_18 = arith.constant 0 : index
    %19 = vector.load %arg11[%c0_17, %c0_18] : memref<16x1xf32, #tpu.memory_space<vmem>>, vector<16x1xf32>
    %20 = vector.broadcast %19 : vector<16x1xf32> to vector<16x128xf32>
    %21 = arith.addf %18, %20 : vector<16x128xf32>
    %cst_19 = arith.constant 0.000000e+00 : f32
    %22 = vector.broadcast %cst_19 : f32 to vector<16x128xf32>
    %23 = arith.maximumf %21, %22 : vector<16x128xf32>
    %c0_20 = arith.constant 0 : index
    %c0_21 = arith.constant 0 : index
    %c0_22 = arith.constant 0 : index
    %24 = vector.load %arg2[%c0_20, %c0_21, %c0_22] : memref<1x128x8xf32, #tpu.memory_space<vmem>>, vector<1x128x8xf32>
    %25 = vector.shape_cast %24 : vector<1x128x8xf32> to vector<128x8xf32>
    %c0_23 = arith.constant 0 : index
    %c0_24 = arith.constant 0 : index
    %c0_25 = arith.constant 0 : index
    %26 = vector.load %arg3[%c0_23, %c0_24, %c0_25] : memref<1x8x128xf32, #tpu.memory_space<vmem>>, vector<1x8x128xf32>
    %27 = vector.shape_cast %26 : vector<1x8x128xf32> to vector<8x128xf32>
    %cst_26 = arith.constant dense<0.000000e+00> : vector<128x128xf32>
    %28 = tpu.matmul %25, %27, %cst_26 {dimension_numbers = #tpu.dot_dimension_numbers<[1], [0], [0], [1], [0, 0, 1, 1], [], []>} : vector<128x8xf32>, vector<8x128xf32>, vector<128x128xf32> -> vector<128x128xf32>
    %cst_27 = arith.constant 0.000000e+00 : f32
    %29 = vector.broadcast %cst_27 : f32 to vector<128x128xf32>
    %30 = arith.maximumf %28, %29 : vector<128x128xf32>
    %31 = tpu.iota {dimensions = array<i32: 1>} : vector<128x128xi32>
    %32 = arith.sitofp %31 : vector<128x128xi32> to vector<128x128xf32>
    %cst_28 = arith.constant 0.000000e+00 : f32
    %33 = vector.broadcast %cst_28 : f32 to vector<128x128xf32>
    %cst_29 = arith.constant 0.000000e+00 : f32
    %34 = vector.broadcast %cst_29 : f32 to vector<128x1xf32>
    %cst_30 = arith.constant dense<0x7F800000> : vector<128xf32>
    %35 = vector.multi_reduction <minimumf>, %30, %cst_30 [1] : vector<128x128xf32> to vector<128xf32>
    %36 = vector.shape_cast %35 : vector<128xf32> to vector<128x1xf32>
    %37 = vector.broadcast %36 : vector<128x1xf32> to vector<128x128xf32>
    %38 = arith.cmpf ole, %30, %37 : vector<128x128xf32>
    %cst_31 = arith.constant 1.000000e+30 : f32
    %39 = vector.broadcast %cst_31 : f32 to vector<128x128xf32>
    %40 = arith.select %38, %32, %39 : vector<128x128xi1>, vector<128x128xf32>
    %cst_32 = arith.constant dense<0x7F800000> : vector<128xf32>
    %41 = vector.multi_reduction <minimumf>, %40, %cst_32 [1] : vector<128x128xf32> to vector<128xf32>
    %42 = vector.shape_cast %41 : vector<128xf32> to vector<128x1xf32>
    %43 = vector.broadcast %42 : vector<128x1xf32> to vector<128x128xf32>
    %44 = arith.cmpf oeq, %32, %43 : vector<128x128xf32>
    %45 = math.sqrt %36 : vector<128x1xf32>
    %cst_33 = arith.constant 9.99999993E-9 : f32
    %46 = vector.broadcast %cst_33 : f32 to vector<128x1xf32>
    %47 = arith.addf %45, %46 : vector<128x1xf32>
    %48 = tpu.reciprocal %47 {approx = true} : vector<128x1xf32> -> vector<128x1xf32>
    %49 = arith.addf %34, %48 : vector<128x1xf32>
    %cst_34 = arith.constant 0.000000e+00 : f32
    %50 = vector.shape_cast %48 : vector<128x1xf32> to vector<128x1xf32>
    %51 = vector.broadcast %50 : vector<128x1xf32> to vector<128x128xf32>
    %52 = vector.broadcast %cst_34 : f32 to vector<128x128xf32>
    %53 = arith.select %44, %51, %52 : vector<128x128xi1>, vector<128x128xf32>
    %54 = arith.addf %33, %53 : vector<128x128xf32>
    %cst_35 = arith.constant 1.000000e+30 : f32
    %55 = vector.broadcast %cst_35 : f32 to vector<128x128xf32>
    %56 = arith.select %44, %55, %30 : vector<128x128xi1>, vector<128x128xf32>
    %cst_36 = arith.constant dense<0x7F800000> : vector<128xf32>
    %57 = vector.multi_reduction <minimumf>, %56, %cst_36 [1] : vector<128x128xf32> to vector<128xf32>
    %58 = vector.shape_cast %57 : vector<128xf32> to vector<128x1xf32>
    %59 = vector.broadcast %58 : vector<128x1xf32> to vector<128x128xf32>
    %60 = arith.cmpf ole, %56, %59 : vector<128x128xf32>
    %cst_37 = arith.constant 1.000000e+30 : f32
    %61 = vector.broadcast %cst_37 : f32 to vector<128x128xf32>
    %62 = arith.select %60, %32, %61 : vector<128x128xi1>, vector<128x128xf32>
    %cst_38 = arith.constant dense<0x7F800000> : vector<128xf32>
    %63 = vector.multi_reduction <minimumf>, %62, %cst_38 [1] : vector<128x128xf32> to vector<128xf32>
    %64 = vector.shape_cast %63 : vector<128xf32> to vector<128x1xf32>
    %65 = vector.broadcast %64 : vector<128x1xf32> to vector<128x128xf32>
    %66 = arith.cmpf oeq, %32, %65 : vector<128x128xf32>
    %67 = math.sqrt %58 : vector<128x1xf32>
    %cst_39 = arith.constant 9.99999993E-9 : f32
    %68 = vector.broadcast %cst_39 : f32 to vector<128x1xf32>
    %69 = arith.addf %67, %68 : vector<128x1xf32>
    %70 = tpu.reciprocal %69 {approx = true} : vector<128x1xf32> -> vector<128x1xf32>
    %71 = arith.addf %49, %70 : vector<128x1xf32>
    %cst_40 = arith.constant 0.000000e+00 : f32
    %72 = vector.shape_cast %70 : vector<128x1xf32> to vector<128x1xf32>
    %73 = vector.broadcast %72 : vector<128x1xf32> to vector<128x128xf32>
    %74 = vector.broadcast %cst_40 : f32 to vector<128x128xf32>
    %75 = arith.select %66, %73, %74 : vector<128x128xi1>, vector<128x128xf32>
    %76 = arith.addf %54, %75 : vector<128x128xf32>
    %cst_41 = arith.constant 1.000000e+30 : f32
    %77 = vector.broadcast %cst_41 : f32 to vector<128x128xf32>
    %78 = arith.select %66, %77, %56 : vector<128x128xi1>, vector<128x128xf32>
    %cst_42 = arith.constant dense<0x7F800000> : vector<128xf32>
    %79 = vector.multi_reduction <minimumf>, %78, %cst_42 [1] : vector<128x128xf32> to vector<128xf32>
    %80 = vector.shape_cast %79 : vector<128xf32> to vector<128x1xf32>
    %81 = vector.broadcast %80 : vector<128x1xf32> to vector<128x128xf32>
    %82 = arith.cmpf ole, %78, %81 : vector<128x128xf32>
    %cst_43 = arith.constant 1.000000e+30 : f32
    %83 = vector.broadcast %cst_43 : f32 to vector<128x128xf32>
    %84 = arith.select %82, %32, %83 : vector<128x128xi1>, vector<128x128xf32>
    %cst_44 = arith.constant dense<0x7F800000> : vector<128xf32>
    %85 = vector.multi_reduction <minimumf>, %84, %cst_44 [1] : vector<128x128xf32> to vector<128xf32>
    %86 = vector.shape_cast %85 : vector<128xf32> to vector<128x1xf32>
    %87 = vector.broadcast %86 : vector<128x1xf32> to vector<128x128xf32>
    %88 = arith.cmpf oeq, %32, %87 : vector<128x128xf32>
    %89 = math.sqrt %80 : vector<128x1xf32>
    %cst_45 = arith.constant 9.99999993E-9 : f32
    %90 = vector.broadcast %cst_45 : f32 to vector<128x1xf32>
    %91 = arith.addf %89, %90 : vector<128x1xf32>
    %92 = tpu.reciprocal %91 {approx = true} : vector<128x1xf32> -> vector<128x1xf32>
    %93 = arith.addf %71, %92 : vector<128x1xf32>
    %cst_46 = arith.constant 0.000000e+00 : f32
    %94 = vector.shape_cast %92 : vector<128x1xf32> to vector<128x1xf32>
    %95 = vector.broadcast %94 : vector<128x1xf32> to vector<128x128xf32>
    %96 = vector.broadcast %cst_46 : f32 to vector<128x128xf32>
    %97 = arith.select %88, %95, %96 : vector<128x128xi1>, vector<128x128xf32>
    %98 = arith.addf %76, %97 : vector<128x128xf32>
    %cst_47 = arith.constant 1.000000e+00 : f32
    %99 = vector.broadcast %cst_47 : f32 to vector<128x1xf32>
    %100 = arith.divf %99, %93 : vector<128x1xf32>
    %101 = vector.broadcast %100 : vector<128x1xf32> to vector<128x128xf32>
    %102 = arith.mulf %98, %101 : vector<128x128xf32>
    %103 = arith.truncf %11 : vector<16x128xf32> to vector<16x128xbf16>
    %104 = arith.truncf %102 : vector<128x128xf32> to vector<128x128xbf16>
    %cst_48 = arith.constant dense<0.000000e+00> : vector<16x128xf32>
    %105 = tpu.matmul %103, %104, %cst_48 {dimension_numbers = #tpu.dot_dimension_numbers<[1], [1], [0], [0], [0, 0, 1, 0], [], []>} : vector<16x128xbf16>, vector<128x128xbf16>, vector<16x128xf32> -> vector<16x128xf32>
    %106 = arith.addf %23, %105 : vector<16x128xf32>
    %c0_49 = arith.constant 0 : index
    %c0_50 = arith.constant 0 : index
    %c0_51 = arith.constant 0 : index
    %107 = vector.load %arg12[%c0_49, %c0_50, %c0_51] : memref<1x16x128xf32, #tpu.memory_space<vmem>>, vector<1x16x128xf32>
    %108 = vector.shape_cast %107 : vector<1x16x128xf32> to vector<16x128xf32>
    %109 = vector.shape_cast %106 : vector<16x128xf32> to vector<1x16x128xf32>
    tpu.vector_store %arg12[%c0_49, %c0_50, %c0_51], %109 {strides = array<i32>} : memref<1x16x128xf32, #tpu.memory_space<vmem>>, vector<1x16x128xf32>,
    return
  }
  func.func @transform_0(%arg0: i32, %arg1: i32) -> (i32, i32, i32) {
    %c0_i32 = arith.constant 0 : i32
    %c0_i32_0 = arith.constant 0 : i32
    return %arg0, %arg1, %c0_i32 : i32, i32, i32
  }
  func.func @transform_1(%arg0: i32, %arg1: i32) -> (i32, i32, i32) {
    %c0_i32 = arith.constant 0 : i32
    %c0_i32_0 = arith.constant 0 : i32
    %c0_i32_1 = arith.constant 0 : i32
    return %arg0, %c0_i32, %c0_i32_0 : i32, i32, i32
  }
  func.func @transform_2(%arg0: i32, %arg1: i32) -> (i32, i32, i32) {
    %c0_i32 = arith.constant 0 : i32
    %c0_i32_0 = arith.constant 0 : i32
    %c0_i32_1 = arith.constant 0 : i32
    return %arg0, %c0_i32, %c0_i32_0 : i32, i32, i32
  }
  func.func @transform_3(%arg0: i32, %arg1: i32) -> (i32, i32, i32) {
    %c0_i32 = arith.constant 0 : i32
    %c0_i32_0 = arith.constant 0 : i32
    return %arg0, %c0_i32, %arg1 : i32, i32, i32
  }
  func.func @transform_4(%arg0: i32, %arg1: i32) -> (i32, i32) {
    %c0_i32 = arith.constant 0 : i32
    %c0_i32_0 = arith.constant 0 : i32
    %c0_i32_1 = arith.constant 0 : i32
    return %c0_i32, %c0_i32_0 : i32, i32
  }
  func.func @transform_5(%arg0: i32, %arg1: i32) -> (i32, i32) {
    %c0_i32 = arith.constant 0 : i32
    %c0_i32_0 = arith.constant 0 : i32
    %c0_i32_1 = arith.constant 0 : i32
    return %c0_i32, %c0_i32_0 : i32, i32
  }
  func.func @transform_6(%arg0: i32, %arg1: i32) -> (i32, i32) {
    %c0_i32 = arith.constant 0 : i32
    %c0_i32_0 = arith.constant 0 : i32
    %c0_i32_1 = arith.constant 0 : i32
    return %c0_i32, %c0_i32_0 : i32, i32
  }
  func.func @transform_7(%arg0: i32, %arg1: i32) -> (i32, i32) {
    %c0_i32 = arith.constant 0 : i32
    %c0_i32_0 = arith.constant 0 : i32
    %c0_i32_1 = arith.constant 0 : i32
    return %c0_i32, %c0_i32_0 : i32, i32
  }
  func.func @transform_8(%arg0: i32, %arg1: i32) -> (i32, i32) {
    %c0_i32 = arith.constant 0 : i32
    %c0_i32_0 = arith.constant 0 : i32
    %c0_i32_1 = arith.constant 0 : i32
    return %c0_i32, %c0_i32_0 : i32, i32
  }
  func.func @transform_9(%arg0: i32, %arg1: i32) -> (i32, i32) {
    %c0_i32 = arith.constant 0 : i32
    %c0_i32_0 = arith.constant 0 : i32
    %c0_i32_1 = arith.constant 0 : i32
    return %c0_i32, %c0_i32_0 : i32, i32
  }
  func.func @transform_10(%arg0: i32, %arg1: i32) -> (i32, i32, i32) {
    %c0_i32 = arith.constant 0 : i32
    %c0_i32_0 = arith.constant 0 : i32
    return %arg0, %c0_i32, %arg1 : i32, i32, i32
  }
}

</mosaic_0001>

<llo_original>
// kernel: tpu_custom_call.1
$region0: #{tpu_custom_call.1}
  #allocation0 [shape = 'u32[]', space=smem, size = 0x4, offset = 0x4, fixed_abs, tag = 'smem constant byte address 0x4 - core index']
  #allocation1 [shape = 'u32[72,128]{1,0:T(1,128)}', space=vmem, size = 0x9000, scoped, tag = 'internal scratch']
  %s0 = inlined_call_operand.vmem [shape: f32[2,128,8], index: 0, kind: input, shape index: {}]
  %s1 = inlined_call_operand.vmem [shape: f32[2,8,128], index: 1, kind: input, shape index: {}]
  %s2 = inlined_call_operand.vmem [shape: bf16[2,16,128], index: 2, kind: input, shape index: {}]
  %s3 = inlined_call_operand.vmem [shape: bf16[2,8,128], index: 3, kind: input, shape index: {}]
  %s4 = inlined_call_operand.vmem [shape: bf16[16,16], index: 4, kind: input, shape index: {}]
  %s5 = inlined_call_operand.vmem [shape: f32[16,1], index: 5, kind: input, shape index: {}]
  %s6 = inlined_call_operand.vmem [shape: f32[16,1], index: 6, kind: input, shape index: {}]
  %s7 = inlined_call_operand.vmem [shape: bf16[16,8], index: 7, kind: input, shape index: {}]
  %s8 = inlined_call_operand.vmem [shape: f32[16,1], index: 8, kind: input, shape index: {}]
  %s9 = inlined_call_operand.vmem [shape: f32[16,1], index: 9, kind: input, shape index: {}]
  %s10 = inlined_call_operand.hbm [shape: f32[2,16,128], index: 10, kind: output, shape index: {}]
  %s11 = sld [smem:[#allocation0]]
  $region73: #{tpu_custom_call.1} parent=0
    _
  %s13 = ssub.s32 1, %s11
  %s14 = scalar_select 0, %s13, %s11
  $region1: #{tpu_custom_call.1} parent=0
    #allocation2 [shape = 'u8[16384]{0}', space=vmem, size = 0x4000, scoped, tag = 'output window, operand 0']
    #allocation3 [shape = 's32[2]{0}', space=sflag, size = 0x8, scoped, tag = 'scoped memory for tpu_custom_call.1']
    %15 = vsyncpa [#allocation3], 0
    %s16 = scalar_lea.sflag [#allocation3], 1
    %17 = vsyncpa %s16, 0
    loop: start=0, step=1, limit=4
    $region2: #{tpu_custom_call.1} parent=1 // loop_pre_header
      _
    $region3: #{tpu_custom_call.1} parent=1 // loop_header
      %s19 = sphi 0, %s23
      %p20 = scmp.ge.s32.totalorder %s19, 4
      %s26 = sphi 0, %s38
      %s27 = sphi 0, %s34
      %s28 = sphi 0, %s26
      %s29 = sphi 0, %s27
      %s30 = sphi 0, %s28
      %s31 = sphi 0, %s29
      %s43 = sphi 0, %s45
      %s46 = sphi 0, %s43
      %s47 = sphi 0, %s46
      %s63 = sphi 0, %s47
      %s69 = sphi 0, %s71
      %s72 = sphi 0, %s69
      %s73 = sphi 0, %s72
      %s89 = sphi 0, %s73
      %s95 = sphi 0, %s97
      %s98 = sphi 0, %s95
      %s99 = sphi 0, %s98
      %s115 = sphi 0, %s99
      %s123 = sphi 0, %s125
      %s126 = sphi 0, %s123
      %s127 = sphi 0, %s126
      %s143 = sphi 0, %s127
      %s147 = sphi 0, %s147
      %s149 = sphi 0, %s147
      %s150 = sphi 0, %s149
      %s164 = sphi 0, %s150
      %s168 = sphi 0, %s168
      %s170 = sphi 0, %s168
      %s171 = sphi 0, %s170
      %s185 = sphi 0, %s171
      %s189 = sphi 0, %s189
      %s191 = sphi 0, %s189
      %s192 = sphi 0, %s191
      %s206 = sphi 0, %s192
      %s210 = sphi 0, %s210
      %s212 = sphi 0, %s210
      %s213 = sphi 0, %s212
      %s227 = sphi 0, %s213
      %s231 = sphi 0, %s231
      %s233 = sphi 0, %s231
      %s234 = sphi 0, %s233
      %s248 = sphi 0, %s234
      %s252 = sphi 0, %s252
      %s254 = sphi 0, %s252
      %s255 = sphi 0, %s254
      %s269 = sphi 0, %s255
      %s277 = sphi 0, %s279
      %s280 = sphi 0, %s277
      %s281 = sphi 0, %s280
      %s297 = sphi 0, %s281
    $region4: #{tpu_custom_call.1} parent=1 // loop_header_branch
      %22 = sbr.rel (%p20) target = $region8
    $region5: #{tpu_custom_call.1} parent=1 // loop_body
      %s24 = ssub.s32 %s19, 1
      %s25 = ssub.s32 %s19, 2
      %s32 = sadd.s32 1, %s27
      %p33 = scmp.ge.s32.totalorder %s32, 1
      %s34 = scalar_select %p33, 0, %s32
      %s35 = sadd.s32 1, %s26
      %s36 = scalar_select %p33, %s35, %s26
      %p37 = scmp.ge.s32.totalorder %s36, 2
      %s38 = scalar_select %p37, 0, %s36
      %s39 = ssub.s32 %s26, %s38
      %s40 = ssub.s32 %s27, %s34
      %s41 = sor.u32 %s39, %s40
      %p42 = scmp.eq.s32.totalorder %s41, 0
      %s44 = sadd.s32 %s43, 1
      %s45 = scalar_select %p42, %s43, %s44
      %p48 = pneg %p42
      %p49 = scmp.eq.s32.totalorder %s19, 1
      %p50 = por %p48, %p49
      %p51 = scmp.ne.s32.totalorder %s43, %s46
      %p52 = scmp.eq.s32.totalorder %s19, 0
      %p53 = por %p51, %p52
      %p54 = scmp.ne.s32.totalorder %s43, %s46
      %p55 = scmp.eq.s32.totalorder %s24, 1
      %p56 = por %p54, %p55
      %p57 = scmp.ne.s32.totalorder %s46, %s47
      %p58 = scmp.eq.s32.totalorder %s24, 0
      %p59 = por %p57, %p58
      %p60 = scmp.ne.s32.totalorder %s46, %s47
      %p61 = scmp.eq.s32.totalorder %s25, 1
      %p62 = por %p60, %p61
      %p64 = scmp.ne.s32.totalorder %s47, %s63
      %p65 = scmp.eq.s32.totalorder %s25, 0
      %p66 = por %p64, %p65
      %s67 = ssub.s32 %s26, %s38
      %p68 = scmp.eq.s32.totalorder %s67, 0
      %s70 = sadd.s32 %s69, 1
      %s71 = scalar_select %p68, %s69, %s70
      %p74 = pneg %p68
      %p75 = scmp.eq.s32.totalorder %s19, 1
      %p76 = por %p74, %p75
      %p77 = scmp.ne.s32.totalorder %s69, %s72
      %p78 = scmp.eq.s32.totalorder %s19, 0
      %p79 = por %p77, %p78
      %p80 = scmp.ne.s32.totalorder %s69, %s72
      %p81 = scmp.eq.s32.totalorder %s24, 1
      %p82 = por %p80, %p81
      %p83 = scmp.ne.s32.totalorder %s72, %s73
      %p84 = scmp.eq.s32.totalorder %s24, 0
      %p85 = por %p83, %p84
      %p86 = scmp.ne.s32.totalorder %s72, %s73
      %p87 = scmp.eq.s32.totalorder %s25, 1
      %p88 = por %p86, %p87
      %p90 = scmp.ne.s32.totalorder %s73, %s89
      %p91 = scmp.eq.s32.totalorder %s25, 0
      %p92 = por %p90, %p91
      %s93 = ssub.s32 %s26, %s38
      %p94 = scmp.eq.s32.totalorder %s93, 0
      %s96 = sadd.s32 %s95, 1
      %s97 = scalar_select %p94, %s95, %s96
      %p100 = pneg %p94
      %p101 = scmp.eq.s32.totalorder %s19, 1
      %p102 = por %p100, %p101
      %p103 = scmp.ne.s32.totalorder %s95, %s98
      %p104 = scmp.eq.s32.totalorder %s19, 0
      %p105 = por %p103, %p104
      %p106 = scmp.ne.s32.totalorder %s95, %s98
      %p107 = scmp.eq.s32.totalorder %s24, 1
      %p108 = por %p106, %p107
      %p109 = scmp.ne.s32.totalorder %s98, %s99
      %p110 = scmp.eq.s32.totalorder %s24, 0
      %p111 = por %p109, %p110
      %p112 = scmp.ne.s32.totalorder %s98, %s99
      %p113 = scmp.eq.s32.totalorder %s25, 1
      %p114 = por %p112, %p113
      %p116 = scmp.ne.s32.totalorder %s99, %s115
      %p117 = scmp.eq.s32.totalorder %s25, 0
      %p118 = por %p116, %p117
      %s119 = ssub.s32 %s26, %s38
      %s120 = ssub.s32 %s27, %s34
      %s121 = sor.u32 %s119, %s120
      %p122 = scmp.eq.s32.totalorder %s121, 0
      %s124 = sadd.s32 %s123, 1
      %s125 = scalar_select %p122, %s123, %s124
      %p128 = pneg %p122
      %p129 = scmp.eq.s32.totalorder %s19, 1
      %p130 = por %p128, %p129
      %p131 = scmp.ne.s32.totalorder %s123, %s126
      %p132 = scmp.eq.s32.totalorder %s19, 0
      %p133 = por %p131, %p132
      %p134 = scmp.ne.s32.totalorder %s123, %s126
      %p135 = scmp.eq.s32.totalorder %s24, 1
      %p136 = por %p134, %p135
      %p137 = scmp.ne.s32.totalorder %s126, %s127
      %p138 = scmp.eq.s32.totalorder %s24, 0
      %p139 = por %p137, %p138
      %p140 = scmp.ne.s32.totalorder %s126, %s127
      %p141 = scmp.eq.s32.totalorder %s25, 1
      %p142 = por %p140, %p141
      %p144 = scmp.ne.s32.totalorder %s127, %s143
      %p145 = scmp.eq.s32.totalorder %s25, 0
      %p146 = por %p144, %p145
      %s148 = sadd.s32 %s147, 1
      %p151 = scmp.eq.s32.totalorder %s19, 1
      %p152 = scmp.ne.s32.totalorder %s147, %s149
      %p153 = scmp.eq.s32.totalorder %s19, 0
      %p154 = por %p152, %p153
      %p155 = scmp.ne.s32.totalorder %s147, %s149
      %p156 = scmp.eq.s32.totalorder %s24, 1
      %p157 = por %p155, %p156
      %p158 = scmp.ne.s32.totalorder %s149, %s150
      %p159 = scmp.eq.s32.totalorder %s24, 0
      %p160 = por %p158, %p159
      %p161 = scmp.ne.s32.totalorder %s149, %s150
      %p162 = scmp.eq.s32.totalorder %s25, 1
      %p163 = por %p161, %p162
      %p165 = scmp.ne.s32.totalorder %s150, %s164
      %p166 = scmp.eq.s32.totalorder %s25, 0
      %p167 = por %p165, %p166
      %s169 = sadd.s32 %s168, 1
      %p172 = scmp.eq.s32.totalorder %s19, 1
      %p173 = scmp.ne.s32.totalorder %s168, %s170
      %p174 = scmp.eq.s32.totalorder %s19, 0
      %p175 = por %p173, %p174
      %p176 = scmp.ne.s32.totalorder %s168, %s170
      %p177 = scmp.eq.s32.totalorder %s24, 1
      %p178 = por %p176, %p177
      %p179 = scmp.ne.s32.totalorder %s170, %s171
      %p180 = scmp.eq.s32.totalorder %s24, 0
      %p181 = por %p179, %p180
      %p182 = scmp.ne.s32.totalorder %s170, %s171
      %p183 = scmp.eq.s32.totalorder %s25, 1
      %p184 = por %p182, %p183
      %p186 = scmp.ne.s32.totalorder %s171, %s185
      %p187 = scmp.eq.s32.totalorder %s25, 0
      %p188 = por %p186, %p187
      %s190 = sadd.s32 %s189, 1
      %p193 = scmp.eq.s32.totalorder %s19, 1
      %p194 = scmp.ne.s32.totalorder %s189, %s191
      %p195 = scmp.eq.s32.totalorder %s19, 0
      %p196 = por %p194, %p195
      %p197 = scmp.ne.s32.totalorder %s189, %s191
      %p198 = scmp.eq.s32.totalorder %s24, 1
      %p199 = por %p197, %p198
      %p200 = scmp.ne.s32.totalorder %s191, %s192
      %p201 = scmp.eq.s32.totalorder %s24, 0
      %p202 = por %p200, %p201
      %p203 = scmp.ne.s32.totalorder %s191, %s192
      %p204 = scmp.eq.s32.totalorder %s25, 1
      %p205 = por %p203, %p204
      %p207 = scmp.ne.s32.totalorder %s192, %s206
      %p208 = scmp.eq.s32.totalorder %s25, 0
      %p209 = por %p207, %p208
      %s211 = sadd.s32 %s210, 1
      %p214 = scmp.eq.s32.totalorder %s19, 1
      %p215 = scmp.ne.s32.totalorder %s210, %s212
      %p216 = scmp.eq.s32.totalorder %s19, 0
      %p217 = por %p215, %p216
      %p218 = scmp.ne.s32.totalorder %s210, %s212
      %p219 = scmp.eq.s32.totalorder %s24, 1
      %p220 = por %p218, %p219
      %p221 = scmp.ne.s32.totalorder %s212, %s213
      %p222 = scmp.eq.s32.totalorder %s24, 0
      %p223 = por %p221, %p222
      %p224 = scmp.ne.s32.totalorder %s212, %s213
      %p225 = scmp.eq.s32.totalorder %s25, 1
      %p226 = por %p224, %p225
      %p228 = scmp.ne.s32.totalorder %s213, %s227
      %p229 = scmp.eq.s32.totalorder %s25, 0
      %p230 = por %p228, %p229
      %s232 = sadd.s32 %s231, 1
      %p235 = scmp.eq.s32.totalorder %s19, 1
      %p236 = scmp.ne.s32.totalorder %s231, %s233
      %p237 = scmp.eq.s32.totalorder %s19, 0
      %p238 = por %p236, %p237
      %p239 = scmp.ne.s32.totalorder %s231, %s233
      %p240 = scmp.eq.s32.totalorder %s24, 1
      %p241 = por %p239, %p240
      %p242 = scmp.ne.s32.totalorder %s233, %s234
      %p243 = scmp.eq.s32.totalorder %s24, 0
      %p244 = por %p242, %p243
      %p245 = scmp.ne.s32.totalorder %s233, %s234
      %p246 = scmp.eq.s32.totalorder %s25, 1
      %p247 = por %p245, %p246
      %p249 = scmp.ne.s32.totalorder %s234, %s248
      %p250 = scmp.eq.s32.totalorder %s25, 0
      %p251 = por %p249, %p250
      %s253 = sadd.s32 %s252, 1
      %p256 = scmp.eq.s32.totalorder %s19, 1
      %p257 = scmp.ne.s32.totalorder %s252, %s254
      %p258 = scmp.eq.s32.totalorder %s19, 0
      %p259 = por %p257, %p258
      %p260 = scmp.ne.s32.totalorder %s252, %s254
      %p261 = scmp.eq.s32.totalorder %s24, 1
      %p262 = por %p260, %p261
      %p263 = scmp.ne.s32.totalorder %s254, %s255
      %p264 = scmp.eq.s32.totalorder %s24, 0
      %p265 = por %p263, %p264
      %p266 = scmp.ne.s32.totalorder %s254, %s255
      %p267 = scmp.eq.s32.totalorder %s25, 1
      %p268 = por %p266, %p267
      %p270 = scmp.ne.s32.totalorder %s255, %s269
      %p271 = scmp.eq.s32.totalorder %s25, 0
      %p272 = por %p270, %p271
      %s273 = ssub.s32 %s26, %s38
      %s274 = ssub.s32 %s27, %s34
      %s275 = sor.u32 %s273, %s274
      %p276 = scmp.eq.s32.totalorder %s275, 0
      %s278 = sadd.s32 %s277, 1
      %s279 = scalar_select %p276, %s277, %s278
      %p282 = pneg %p276
      %p283 = scmp.eq.s32.totalorder %s19, 1
      %p284 = por %p282, %p283
      %p285 = scmp.ne.s32.totalorder %s277, %s280
      %p286 = scmp.eq.s32.totalorder %s19, 0
      %p287 = por %p285, %p286
      %p288 = scmp.ne.s32.totalorder %s277, %s280
      %p289 = scmp.eq.s32.totalorder %s24, 1
      %p290 = por %p288, %p289
      %p291 = scmp.ne.s32.totalorder %s280, %s281
      %p292 = scmp.eq.s32.totalorder %s24, 0
      %p293 = por %p291, %p292
      %p294 = scmp.ne.s32.totalorder %s280, %s281
      %p295 = scmp.eq.s32.totalorder %s25, 1
      %p296 = por %p294, %p295
      %p298 = scmp.ne.s32.totalorder %s281, %s297
      %p299 = scmp.eq.s32.totalorder %s25, 0
      %p300 = por %p298, %p299
      %p301 = scmp.le.s32.totalorder 1, %s19
      %p302 = scmp.lt.s32.totalorder %s19, 3
      %p303 = pnand %p301, %p302
      %p304 = pneg %p303
      // Predicated region
      $region9: #{tpu_custom_call.1} parent=5 // pred_check
        _
      $region10: #{tpu_custom_call.1} parent=5 // pred_check_branch
        %306 = sbr.rel (%p303) target = $region12
      $region11: #{tpu_custom_call.1} parent=5 // pred_region
        %s307 = ssub.s32 %s19, 1
        // Predicated region
        $region13: #{tpu_custom_call.1} parent=11 // pred_check
          %p308 = pneg %p160
        $region14: #{tpu_custom_call.1} parent=11 // pred_check_branch
          %310 = sbr.rel (%p308) target = $region16
        $region15: #{tpu_custom_call.1} parent=11 // pred_region
          _
        $region16: #{tpu_custom_call.1} parent=11 // pred_fallthru
          _
        // Predicated region
        $region17: #{tpu_custom_call.1} parent=11 // pred_check
          %p311 = pneg %p181
        $region18: #{tpu_custom_call.1} parent=11 // pred_check_branch
          %313 = sbr.rel (%p311) target = $region20
        $region19: #{tpu_custom_call.1} parent=11 // pred_region
          _
        $region20: #{tpu_custom_call.1} parent=11 // pred_fallthru
          _
        // Predicated region
        $region21: #{tpu_custom_call.1} parent=11 // pred_check
          %p314 = pneg %p202
        $region22: #{tpu_custom_call.1} parent=11 // pred_check_branch
          %316 = sbr.rel (%p314) target = $region24
        $region23: #{tpu_custom_call.1} parent=11 // pred_region
          _
        $region24: #{tpu_custom_call.1} parent=11 // pred_fallthru
          _
        // Predicated region
        $region25: #{tpu_custom_call.1} parent=11 // pred_check
          %p317 = pneg %p223
        $region26: #{tpu_custom_call.1} parent=11 // pred_check_branch
          %319 = sbr.rel (%p317) target = $region28
        $region27: #{tpu_custom_call.1} parent=11 // pred_region
          _
        $region28: #{tpu_custom_call.1} parent=11 // pred_fallthru
          _
        // Predicated region
        $region29: #{tpu_custom_call.1} parent=11 // pred_check
          %p320 = pneg %p244
        $region30: #{tpu_custom_call.1} parent=11 // pred_check_branch
          %322 = sbr.rel (%p320) target = $region32
        $region31: #{tpu_custom_call.1} parent=11 // pred_region
          _
        $region32: #{tpu_custom_call.1} parent=11 // pred_fallthru
          _
        // Predicated region
        $region33: #{tpu_custom_call.1} parent=11 // pred_check
          %p323 = pneg %p265
        $region34: #{tpu_custom_call.1} parent=11 // pred_check_branch
          %325 = sbr.rel (%p323) target = $region36
        $region35: #{tpu_custom_call.1} parent=11 // pred_region
          _
        $region36: #{tpu_custom_call.1} parent=11 // pred_fallthru
          _
      $region12: #{tpu_custom_call.1} parent=5 // pred_fallthru
        _
      %p326 = scmp.lt.s32.totalorder %s19, 2
      // Predicated region
      $region37: #{tpu_custom_call.1} parent=5 // pred_check
        %p327 = pneg %p326
      $region38: #{tpu_custom_call.1} parent=5 // pred_check_branch
        %329 = sbr.rel (%p327) target = $region40
      $region39: #{tpu_custom_call.1} parent=5 // pred_region
        // Predicated region
        $region41: #{tpu_custom_call.1} parent=39 // pred_check
          %p330 = pneg %p53
        $region42: #{tpu_custom_call.1} parent=39 // pred_check_branch
          %332 = sbr.rel (%p330) target = $region44
        $region43: #{tpu_custom_call.1} parent=39 // pred_region
          %s333 = smul.u32 16, %s27
          %p334 = scmp.lt.s32.totalorder %s26, 1
          %s335 = scalar_select %p334, %s26, 1
          %p336 = scmp.lt.s32.totalorder %s333, 15
          %s337 = scalar_select %p336, %s333, 15
          %s338 = smul.addr %s335, 16
          %s339 = sadd.s32 %s337, %s338
          %s340 = smul.addr %s339, 8
          %s341 = scalar_lea.vmem %s0, %s340
          %s342 = smul.u32 16, %s27
        $region44: #{tpu_custom_call.1} parent=39 // pred_fallthru
          _
        // Predicated region
        $region45: #{tpu_custom_call.1} parent=39 // pred_check
          %p343 = pneg %p79
        $region46: #{tpu_custom_call.1} parent=39 // pred_check_branch
          %345 = sbr.rel (%p343) target = $region48
        $region47: #{tpu_custom_call.1} parent=39 // pred_region
          %p346 = scmp.lt.s32.totalorder %s26, 1
          %s347 = scalar_select %p346, %s26, 1
          %s348 = smul.addr %s347, 8
          %s349 = scalar_lea.vmem %s1, %s348
        $region48: #{tpu_custom_call.1} parent=39 // pred_fallthru
          _
        // Predicated region
        $region49: #{tpu_custom_call.1} parent=39 // pred_check
          %p350 = pneg %p105
        $region50: #{tpu_custom_call.1} parent=39 // pred_check_branch
          %352 = sbr.rel (%p350) target = $region52
        $region51: #{tpu_custom_call.1} parent=39 // pred_region
          %p353 = scmp.lt.s32.totalorder %s26, 1
          %s354 = scalar_select %p353, %s26, 1
          %s355 = smul.addr %s354, 2
          %s356 = smul.addr %s355, 4
          %s357 = scalar_lea.vmem %s2, %s356
        $region52: #{tpu_custom_call.1} parent=39 // pred_fallthru
          _
        // Predicated region
        $region53: #{tpu_custom_call.1} parent=39 // pred_check
          %p358 = pneg %p133
        $region54: #{tpu_custom_call.1} parent=39 // pred_check_branch
          %360 = sbr.rel (%p358) target = $region56
        $region55: #{tpu_custom_call.1} parent=39 // pred_region
          %p361 = scmp.lt.s32.totalorder %s26, 1
          %s362 = scalar_select %p361, %s26, 1
          %p363 = scmp.lt.s32.totalorder %s27, 0
          %s364 = scalar_select %p363, %s27, 0
          %s365 = sadd.s32 %s364, %s362
          %s366 = smul.addr %s365, 4
          %s367 = scalar_lea.vmem %s3, %s366
        $region56: #{tpu_custom_call.1} parent=39 // pred_fallthru
          _
      $region40: #{tpu_custom_call.1} parent=5 // pred_fallthru
        _
      %p368 = scmp.le.s32.totalorder 1, %s19
      %p369 = scmp.lt.s32.totalorder %s19, 3
      %p370 = pnand %p368, %p369
      %p371 = pneg %p370
      // Predicated region
      $region57: #{tpu_custom_call.1} parent=5 // pred_check
        _
      $region58: #{tpu_custom_call.1} parent=5 // pred_check_branch
        %373 = sbr.rel (%p370) target = $region60
      $region59: #{tpu_custom_call.1} parent=5 // pred_region
        %s374 = ssub.s32 %s19, 1
        %s375 = smul.u32 16, %s29
        %p376 = scmp.lt.s32.totalorder %s28, 1
        %s377 = scalar_select %p376, %s28, 1
        %p378 = scmp.lt.s32.totalorder %s375, 15
        %s379 = scalar_select %p378, %s375, 15
        %s380 = smul.addr %s377, 16
        %s381 = sadd.s32 %s379, %s380
        %s382 = smul.addr %s381, 8
        %s383 = scalar_lea.vmem %s0, %s382
        %p384 = pneg %p59
        %p385 = pneg %p56
        %p386 = scmp.lt.s32.totalorder %s28, 1
        %s387 = scalar_select %p386, %s28, 1
        %s388 = smul.addr %s387, 8
        %s389 = scalar_lea.vmem %s1, %s388
        %p390 = pneg %p85
        %p391 = pneg %p82
        %p392 = scmp.lt.s32.totalorder %s28, 1
        %s393 = scalar_select %p392, %s28, 1
        %s394 = smul.addr %s393, 2
        %s395 = smul.addr %s394, 4
        %s396 = scalar_lea.vmem %s2, %s395
        %p397 = pneg %p111
        %p398 = pneg %p108
        %p399 = scmp.lt.s32.totalorder %s28, 1
        %s400 = scalar_select %p399, %s28, 1
        %p401 = scmp.lt.s32.totalorder %s29, 0
        %s402 = scalar_select %p401, %s29, 0
        %s403 = sadd.s32 %s402, %s400
        %s404 = smul.addr %s403, 4
        %s405 = scalar_lea.vmem %s3, %s404
        %p406 = pneg %p139
        %p407 = pneg %p136
        %p408 = pneg %p160
        %p409 = pneg %p157
        %p410 = pneg %p181
        %p411 = pneg %p178
        %p412 = pneg %p202
        %p413 = pneg %p199
        %p414 = pneg %p223
        %p415 = pneg %p220
        %p416 = pneg %p244
        %p417 = pneg %p241
        %p418 = pneg %p265
        %p419 = pneg %p262
        %p420 = pneg %p293
        %p421 = pneg %p290
        %s422 = sand.u32 %s280, 1
        %s423 = scalar_lea.sflag [#allocation3], %s422
        %s424 = sand.u32 %s280, 1
        %s425 = smul.addr %s424, 16
        %s426 = scalar_lea.vmem [#allocation2], %s425
        %s427 = smul.u32 16, %s29
        %p428 = scmp.lt.s32.totalorder %s28, 1
        %s429 = scalar_select %p428, %s28, 1
        %p430 = scmp.lt.s32.totalorder %s427, 15
        %s431 = scalar_select %p430, %s427, 15
        %s432 = smul.addr %s429, 16
        %s433 = sadd.s32 %s431, %s432
        %s434 = smul.addr %s433, 8
        %s435 = scalar_lea.vmem %s0, %s434
        %s436 = smul.u32 16, %s29
        %p437 = scmp.lt.s32.totalorder %s28, 1
        %s438 = scalar_select %p437, %s28, 1
        %s439 = smul.addr %s438, 8
        %s440 = scalar_lea.vmem %s1, %s439
        %p441 = scmp.lt.s32.totalorder %s28, 1
        %s442 = scalar_select %p441, %s28, 1
        %s443 = smul.addr %s442, 2
        %s444 = smul.addr %s443, 4
        %s445 = scalar_lea.vmem %s2, %s444
        %p446 = scmp.lt.s32.totalorder %s28, 1
        %s447 = scalar_select %p446, %s28, 1
        %p448 = scmp.lt.s32.totalorder %s29, 0
        %s449 = scalar_select %p448, %s29, 0
        %s450 = sadd.s32 %s449, %s447
        %s451 = smul.addr %s450, 4
        %s452 = scalar_lea.vmem %s3, %s451
        %v454 = vld [vmem:[%s4] sm:$0xf]
        %v455 = vld [vmem:[%s4 + $0x4] sm:$0xf]
        %v456 = vld [vmem:[%s445] sm:$0xf]
        %v457 = vld [vmem:[%s445 + $0x4] sm:$0xf]
        %v460 = vunpack.c.l.b16 %v454
        %v461 = vunpack.c.l.b16 %v455
        %v462 = vpack.c.b16 %v461, %v460
        %v465 = vunpack.c.l.b16 %v456
        %v466 = vunpack.c.l.b16 %v457
        %v467 = vpack.c.b16 %v466, %v465
        %vm469 = vcmask 130048
        %v471 = vsel %vm469, %v462, 0
        %473 = vmatpush.bf16.msra.mxu0 0
        %474 = vmatpush.bf16.msra.mxu0 0
        %475 = vmatpush.bf16.msra.mxu0 0
        %476 = vmatpush.bf16.msra.mxu0 0
        %477 = vmatpush.bf16.msra.mxu0 0
        %478 = vmatpush.bf16.msra.mxu0 0
        %479 = vmatpush.bf16.msra.mxu0 0
        %480 = vmatpush.bf16.msra.mxu0 %v467
        %481 = vmatmul.bf16.gmra.mxu0 %v471
        %v482 = vpop.f32.mrf.mxu0
        %v483 = vadd.f32 0.0, %v482
        %v484 = vpop.f32.mrf.mxu0
        %v485 = vadd.f32 0.0, %v484
        %486 = vdwg.mxu0
        %v487 = vld [vmem:[%s5] sm:$0xff]
        %v488 = vld [vmem:[%s5 + $0x8] sm:$0xff]
        %490 = vset.pattern.permute.xlu0 0
        %491 = vperm.xlu0 %490, %v487
        %v492 = vpop.permute.xlu0 %491
        %495 = vset.pattern.permute.xlu0 0
        %496 = vperm.xlu0 %495, %v488
        %v497 = vpop.permute.xlu0 %496
        %v499 = vmul.f32 %v483, %v492
        %v500 = vmul.f32 %v485, %v497
        %v501 = vld [vmem:[%s6] sm:$0xff]
        %v502 = vld [vmem:[%s6 + $0x8] sm:$0xff]
        %504 = vset.pattern.permute.xlu0 0
        %505 = vperm.xlu0 %504, %v501
        %v506 = vpop.permute.xlu0 %505
        %509 = vset.pattern.permute.xlu0 0
        %510 = vperm.xlu0 %509, %v502
        %v511 = vpop.permute.xlu0 %510
        %v513 = vadd.f32 %v499, %v506
        %v514 = vadd.f32 %v500, %v511
        %v515 = vmax.f32 %v513, 0.0
        %v516 = vmax.f32 %v514, 0.0
        %v517 = vld [vmem:[%s7] sm:$0xf]
        %v518 = vld [vmem:[%s7 + $0x4] sm:$0xf]
        %v519 = vld [vmem:[%s452] sm:$0xf]
        %v522 = vunpack.c.l.b16 %v517
        %v523 = vunpack.c.l.b16 %v518
        %v524 = vpack.c.b16 %v523, %v522
        %vm525 = vcmask 64512
        %v527 = vsel %vm525, %v524, 0
        %vm529 = vcmask 1043456
        %v531 = vsel %vm529, %v519, 0
        %533 = vmatpush.bf16.msra.mxu0 0
        %534 = vmatpush.bf16.msra.mxu0 0
        %535 = vmatpush.bf16.msra.mxu0 0
        %536 = vmatpush.bf16.msra.mxu0 0
        %537 = vmatpush.bf16.msra.mxu0 0
        %538 = vmatpush.bf16.msra.mxu0 0
        %539 = vmatpush.bf16.msra.mxu0 0
        %540 = vmatpush.bf16.msra.mxu0 %v531
        %541 = vmatmul.bf16.gmra.mxu0 %v527
        %v542 = vpop.f32.mrf.mxu0
        %v543 = vadd.f32 0.0, %v542
        %v544 = vpop.f32.mrf.mxu0
        %v545 = vadd.f32 0.0, %v544
        %546 = vdwg.mxu0
        %v547 = vld [vmem:[%s8] sm:$0xff]
        %v548 = vld [vmem:[%s8 + $0x8] sm:$0xff]
        %550 = vset.pattern.permute.xlu0 0
        %551 = vperm.xlu0 %550, %v547
        %v552 = vpop.permute.xlu0 %551
        %555 = vset.pattern.permute.xlu0 0
        %556 = vperm.xlu0 %555, %v548
        %v557 = vpop.permute.xlu0 %556
        %v559 = vmul.f32 %v543, %v552
        %v560 = vmul.f32 %v545, %v557
        %v561 = vld [vmem:[%s9] sm:$0xff]
        %v562 = vld [vmem:[%s9 + $0x8] sm:$0xff]
        %564 = vset.pattern.permute.xlu0 0
        %565 = vperm.xlu0 %564, %v561
        %v566 = vpop.permute.xlu0 %565
        %569 = vset.pattern.permute.xlu0 0
        %570 = vperm.xlu0 %569, %v562
        %v571 = vpop.permute.xlu0 %570
        %v573 = vadd.f32 %v559, %v566
        %v574 = vadd.f32 %v560, %v571
        %v575 = vmax.f32 %v573, 0.0
        %v576 = vmax.f32 %v574, 0.0
        %v577 = vld [vmem:[%s435] sm:$0xff]
        %v578 = vld [vmem:[%s435 + $0x8] sm:$0xff]
        %v579 = vld [vmem:[%s435 + $0x10] sm:$0xff]
        %v580 = vld [vmem:[%s435 + $0x18] sm:$0xff]
        %v581 = vld [vmem:[%s435 + $0x20] sm:$0xff]
        %v582 = vld [vmem:[%s435 + $0x28] sm:$0xff]
        %v583 = vld [vmem:[%s435 + $0x30] sm:$0xff]
        %v584 = vld [vmem:[%s435 + $0x38] sm:$0xff]
        %v585 = vld [vmem:[%s435 + $0x40] sm:$0xff]
        %v586 = vld [vmem:[%s435 + $0x48] sm:$0xff]
        %v587 = vld [vmem:[%s435 + $0x50] sm:$0xff]
        %v588 = vld [vmem:[%s435 + $0x58] sm:$0xff]
        %v589 = vld [vmem:[%s435 + $0x60] sm:$0xff]
        %v590 = vld [vmem:[%s435 + $0x68] sm:$0xff]
        %v591 = vld [vmem:[%s435 + $0x70] sm:$0xff]
        %v592 = vld [vmem:[%s435 + $0x78] sm:$0xff]
        %v593 = vld [vmem:[%s440] sm:$0xff]
        %v595 = vsel %vm525, %v577, 0
        %v598 = vsel %vm525, %v578, 0
        %v601 = vsel %vm525, %v579, 0
        %v604 = vsel %vm525, %v580, 0
        %v607 = vsel %vm525, %v581, 0
        %v610 = vsel %vm525, %v582, 0
        %v613 = vsel %vm525, %v583, 0
        %v616 = vsel %vm525, %v584, 0
        %v619 = vsel %vm525, %v585, 0
        %v622 = vsel %vm525, %v586, 0
        %v625 = vsel %vm525, %v587, 0
        %v628 = vsel %vm525, %v588, 0
        %v631 = vsel %vm525, %v589, 0
        %v634 = vsel %vm525, %v590, 0
        %v637 = vsel %vm525, %v591, 0
        %v640 = vsel %vm525, %v592, 0
        %642 = vmatpush.msra.mxu0 0.0
        %643 = vmatpush.msra.mxu0 0.0
        %644 = vmatpush.msra.mxu0 0.0
        %645 = vmatpush.msra.mxu0 0.0
        %646 = vmatpush.msra.mxu0 0.0
        %647 = vmatpush.msra.mxu0 0.0
        %648 = vmatpush.msra.mxu0 0.0
        %649 = vmatpush.msra.mxu0 0.0
        %650 = vmatpush.msra.mxu0 0.0
        %651 = vmatpush.msra.mxu0 0.0
        %652 = vmatpush.msra.mxu0 0.0
        %653 = vmatpush.msra.mxu0 0.0
        %654 = vmatpush.msra.mxu0 0.0
        %655 = vmatpush.msra.mxu0 0.0
        %656 = vmatpush.msra.mxu0 0.0
        %657 = vmatpush.msra.mxu0 %v593
        %658 = vmatmul.f32.gmra.mxu0 %v595
        %v659 = vpop.f32.mrf.mxu0
        %v660 = vadd.f32 0.0, %v659
        %661 = vmatmul.f32.gmra.mxu0 %v598
        %v662 = vpop.f32.mrf.mxu0
        %v663 = vadd.f32 0.0, %v662
        %664 = vmatmul.f32.gmra.mxu0 %v601
        %v665 = vpop.f32.mrf.mxu0
        %v666 = vadd.f32 0.0, %v665
        %667 = vmatmul.f32.gmra.mxu0 %v604
        %v668 = vpop.f32.mrf.mxu0
        %v669 = vadd.f32 0.0, %v668
        %670 = vmatmul.f32.gmra.mxu0 %v607
        %v671 = vpop.f32.mrf.mxu0
        %v672 = vadd.f32 0.0, %v671
        %673 = vmatmul.f32.gmra.mxu0 %v610
        %v674 = vpop.f32.mrf.mxu0
        %v675 = vadd.f32 0.0, %v674
        %676 = vmatmul.f32.gmra.mxu0 %v613
        %v677 = vpop.f32.mrf.mxu0
        %v678 = vadd.f32 0.0, %v677
        %679 = vmatmul.f32.gmra.mxu0 %v616
        %v680 = vpop.f32.mrf.mxu0
        %v681 = vadd.f32 0.0, %v680
        %682 = vmatmul.f32.gmra.mxu0 %v619
        %v683 = vpop.f32.mrf.mxu0
        %v684 = vadd.f32 0.0, %v683
        %685 = vmatmul.f32.gmra.mxu0 %v622
        %v686 = vpop.f32.mrf.mxu0
        %v687 = vadd.f32 0.0, %v686
        %688 = vmatmul.f32.gmra.mxu0 %v625
        %v689 = vpop.f32.mrf.mxu0
        %v690 = vadd.f32 0.0, %v689
        %691 = vmatmul.f32.gmra.mxu0 %v628
        %v692 = vpop.f32.mrf.mxu0
        %v693 = vadd.f32 0.0, %v692
        %694 = vmatmul.f32.gmra.mxu0 %v631
        %v695 = vpop.f32.mrf.mxu0
        %v696 = vadd.f32 0.0, %v695
        %697 = vmatmul.f32.gmra.mxu0 %v634
        %v698 = vpop.f32.mrf.mxu0
        %v699 = vadd.f32 0.0, %v698
        %700 = vmatmul.f32.gmra.mxu0 %v637
        %v701 = vpop.f32.mrf.mxu0
        %v702 = vadd.f32 0.0, %v701
        %703 = vmatmul.f32.gmra.mxu0 %v640
        %v704 = vpop.f32.mrf.mxu0
        %v705 = vadd.f32 0.0, %v704
        %706 = vdwg.mxu0
        %v707 = vmax.f32 %v660, 0.0
        %v708 = vmax.f32 %v663, 0.0
        %v709 = vmax.f32 %v666, 0.0
        %v710 = vmax.f32 %v669, 0.0
        %v711 = vmax.f32 %v672, 0.0
        %v712 = vmax.f32 %v675, 0.0
        %v713 = vmax.f32 %v678, 0.0
        %v714 = vmax.f32 %v681, 0.0
        %v715 = vmax.f32 %v684, 0.0
        %v716 = vmax.f32 %v687, 0.0
        %v717 = vmax.f32 %v690, 0.0
        %v718 = vmax.f32 %v693, 0.0
        %v719 = vmax.f32 %v696, 0.0
        %v720 = vmax.f32 %v699, 0.0
        %v721 = vmax.f32 %v702, 0.0
        %v722 = vmax.f32 %v705, 0.0
        %v723 = vlaneseq
        %v724 = vand.u32 %v723, 127
        %v725 = vcvt.s32.f32 %v724
        %726 = vmin.xlane.f32.xlu0 %v707
        %v727 = vpop.xlane.xlu0 %726
        %728 = vmin.xlane.f32.xlu0 %v708
        %v729 = vpop.xlane.xlu0 %728
        %730 = vmin.xlane.f32.xlu0 %v709
        %v731 = vpop.xlane.xlu0 %730
        %732 = vmin.xlane.f32.xlu0 %v710
        %v733 = vpop.xlane.xlu0 %732
        %734 = vmin.xlane.f32.xlu0 %v711
        %v735 = vpop.xlane.xlu0 %734
        %736 = vmin.xlane.f32.xlu0 %v712
        %v737 = vpop.xlane.xlu0 %736
        %738 = vmin.xlane.f32.xlu0 %v713
        %v739 = vpop.xlane.xlu0 %738
        %740 = vmin.xlane.f32.xlu0 %v714
        %v741 = vpop.xlane.xlu0 %740
        %742 = vmin.xlane.f32.xlu0 %v715
        %v743 = vpop.xlane.xlu0 %742
        %744 = vmin.xlane.f32.xlu0 %v716
        %v745 = vpop.xlane.xlu0 %744
        %746 = vmin.xlane.f32.xlu0 %v717
        %v747 = vpop.xlane.xlu0 %746
        %748 = vmin.xlane.f32.xlu0 %v718
        %v749 = vpop.xlane.xlu0 %748
        %750 = vmin.xlane.f32.xlu0 %v719
        %v751 = vpop.xlane.xlu0 %750
        %752 = vmin.xlane.f32.xlu0 %v720
        %v753 = vpop.xlane.xlu0 %752
        %754 = vmin.xlane.f32.xlu0 %v721
        %v755 = vpop.xlane.xlu0 %754
        %756 = vmin.xlane.f32.xlu0 %v722
        %v757 = vpop.xlane.xlu0 %756
        %vm758 = vcmp.le.f32.partialorder %v707, %v727
        %vm759 = vcmp.le.f32.partialorder %v708, %v729
        %vm760 = vcmp.le.f32.partialorder %v709, %v731
        %vm761 = vcmp.le.f32.partialorder %v710, %v733
        %vm762 = vcmp.le.f32.partialorder %v711, %v735
        %vm763 = vcmp.le.f32.partialorder %v712, %v737
        %vm764 = vcmp.le.f32.partialorder %v713, %v739
        %vm765 = vcmp.le.f32.partialorder %v714, %v741
        %vm766 = vcmp.le.f32.partialorder %v715, %v743
        %vm767 = vcmp.le.f32.partialorder %v716, %v745
        %vm768 = vcmp.le.f32.partialorder %v717, %v747
        %vm769 = vcmp.le.f32.partialorder %v718, %v749
        %vm770 = vcmp.le.f32.partialorder %v719, %v751
        %vm771 = vcmp.le.f32.partialorder %v720, %v753
        %vm772 = vcmp.le.f32.partialorder %v721, %v755
        %vm773 = vcmp.le.f32.partialorder %v722, %v757
        %v774 = vsel %vm758, %v725, 1e+30
        %v775 = vsel %vm759, %v725, 1e+30
        %v776 = vsel %vm760, %v725, 1e+30
        %v777 = vsel %vm761, %v725, 1e+30
        %v778 = vsel %vm762, %v725, 1e+30
        %v779 = vsel %vm763, %v725, 1e+30
        %v780 = vsel %vm764, %v725, 1e+30
        %v781 = vsel %vm765, %v725, 1e+30
        %v782 = vsel %vm766, %v725, 1e+30
        %v783 = vsel %vm767, %v725, 1e+30
        %v784 = vsel %vm768, %v725, 1e+30
        %v785 = vsel %vm769, %v725, 1e+30
        %v786 = vsel %vm770, %v725, 1e+30
        %v787 = vsel %vm771, %v725, 1e+30
        %v788 = vsel %vm772, %v725, 1e+30
        %v789 = vsel %vm773, %v725, 1e+30
        %790 = vmin.xlane.f32.xlu0 %v774
        %v791 = vpop.xlane.xlu0 %790
        %792 = vmin.xlane.f32.xlu0 %v775
        %v793 = vpop.xlane.xlu0 %792
        %794 = vmin.xlane.f32.xlu0 %v776
        %v795 = vpop.xlane.xlu0 %794
        %796 = vmin.xlane.f32.xlu0 %v777
        %v797 = vpop.xlane.xlu0 %796
        %798 = vmin.xlane.f32.xlu0 %v778
        %v799 = vpop.xlane.xlu0 %798
        %800 = vmin.xlane.f32.xlu0 %v779
        %v801 = vpop.xlane.xlu0 %800
        %802 = vmin.xlane.f32.xlu0 %v780
        %v803 = vpop.xlane.xlu0 %802
        %804 = vmin.xlane.f32.xlu0 %v781
        %v805 = vpop.xlane.xlu0 %804
        %806 = vmin.xlane.f32.xlu0 %v782
        %v807 = vpop.xlane.xlu0 %806
        %808 = vmin.xlane.f32.xlu0 %v783
        %v809 = vpop.xlane.xlu0 %808
        %810 = vmin.xlane.f32.xlu0 %v784
        %v811 = vpop.xlane.xlu0 %810
        %812 = vmin.xlane.f32.xlu0 %v785
        %v813 = vpop.xlane.xlu0 %812
        %814 = vmin.xlane.f32.xlu0 %v786
        %v815 = vpop.xlane.xlu0 %814
        %816 = vmin.xlane.f32.xlu0 %v787
        %v817 = vpop.xlane.xlu0 %816
        %818 = vmin.xlane.f32.xlu0 %v788
        %v819 = vpop.xlane.xlu0 %818
        %820 = vmin.xlane.f32.xlu0 %v789
        %v821 = vpop.xlane.xlu0 %820
        %vm822 = vcmp.eq.f32.partialorder %v725, %v791
        %vm823 = vcmp.eq.f32.partialorder %v725, %v793
        %vm824 = vcmp.eq.f32.partialorder %v725, %v795
        %vm825 = vcmp.eq.f32.partialorder %v725, %v797
        %vm826 = vcmp.eq.f32.partialorder %v725, %v799
        %vm827 = vcmp.eq.f32.partialorder %v725, %v801
        %vm828 = vcmp.eq.f32.partialorder %v725, %v803
        %vm829 = vcmp.eq.f32.partialorder %v725, %v805
        %vm830 = vcmp.eq.f32.partialorder %v725, %v807
        %vm831 = vcmp.eq.f32.partialorder %v725, %v809
        %vm832 = vcmp.eq.f32.partialorder %v725, %v811
        %vm833 = vcmp.eq.f32.partialorder %v725, %v813
        %vm834 = vcmp.eq.f32.partialorder %v725, %v815
        %vm835 = vcmp.eq.f32.partialorder %v725, %v817
        %vm836 = vcmp.eq.f32.partialorder %v725, %v819
        %vm837 = vcmp.eq.f32.partialorder %v725, %v821
        %v838 = vrsqrt.pop %v727
        %v839 = vmul.f32 %v838, %v727
        %v840 = vmul.f32 %v839, %v838
        %v841 = vmul.f32 0.5, %v840
        %v842 = vsub.f32 1.5, %v841
        %v843 = vmul.f32 %v838, %v842
        %v844 = vmul.f32 %v727, %v843
        %vm845 = vcmp.eq.f32.partialorder %v727, inf
        %v846 = vsel %vm845, %v727, %v844
        %vm847 = vcmp.eq.f32.partialorder %v727, 0.0
        %v848 = vand.u32 %v727, 2147483648
        %v849 = vsel %vm847, %v848, %v846
        %v850 = vrsqrt.pop %v729
        %v851 = vmul.f32 %v850, %v729
        %v852 = vmul.f32 %v851, %v850
        %v853 = vmul.f32 0.5, %v852
        %v854 = vsub.f32 1.5, %v853
        %v855 = vmul.f32 %v850, %v854
        %v856 = vmul.f32 %v729, %v855
        %vm857 = vcmp.eq.f32.partialorder %v729, inf
        %v858 = vsel %vm857, %v729, %v856
        %vm859 = vcmp.eq.f32.partialorder %v729, 0.0
        %v860 = vand.u32 %v729, 2147483648
        %v861 = vsel %vm859, %v860, %v858
        %v862 = vrsqrt.pop %v731
        %v863 = vmul.f32 %v862, %v731
        %v864 = vmul.f32 %v863, %v862
        %v865 = vmul.f32 0.5, %v864
        %v866 = vsub.f32 1.5, %v865
        %v867 = vmul.f32 %v862, %v866
        %v868 = vmul.f32 %v731, %v867
        %vm869 = vcmp.eq.f32.partialorder %v731, inf
        %v870 = vsel %vm869, %v731, %v868
        %vm871 = vcmp.eq.f32.partialorder %v731, 0.0
        %v872 = vand.u32 %v731, 2147483648
        %v873 = vsel %vm871, %v872, %v870
        %v874 = vrsqrt.pop %v733
        %v875 = vmul.f32 %v874, %v733
        %v876 = vmul.f32 %v875, %v874
        %v877 = vmul.f32 0.5, %v876
        %v878 = vsub.f32 1.5, %v877
        %v879 = vmul.f32 %v874, %v878
        %v880 = vmul.f32 %v733, %v879
        %vm881 = vcmp.eq.f32.partialorder %v733, inf
        %v882 = vsel %vm881, %v733, %v880
        %vm883 = vcmp.eq.f32.partialorder %v733, 0.0
        %v884 = vand.u32 %v733, 2147483648
        %v885 = vsel %vm883, %v884, %v882
        %v886 = vrsqrt.pop %v735
        %v887 = vmul.f32 %v886, %v735
        %v888 = vmul.f32 %v887, %v886
        %v889 = vmul.f32 0.5, %v888
        %v890 = vsub.f32 1.5, %v889
        %v891 = vmul.f32 %v886, %v890
        %v892 = vmul.f32 %v735, %v891
        %vm893 = vcmp.eq.f32.partialorder %v735, inf
        %v894 = vsel %vm893, %v735, %v892
        %vm895 = vcmp.eq.f32.partialorder %v735, 0.0
        %v896 = vand.u32 %v735, 2147483648
        %v897 = vsel %vm895, %v896, %v894
        %v898 = vrsqrt.pop %v737
        %v899 = vmul.f32 %v898, %v737
        %v900 = vmul.f32 %v899, %v898
        %v901 = vmul.f32 0.5, %v900
        %v902 = vsub.f32 1.5, %v901
        %v903 = vmul.f32 %v898, %v902
        %v904 = vmul.f32 %v737, %v903
        %vm905 = vcmp.eq.f32.partialorder %v737, inf
        %v906 = vsel %vm905, %v737, %v904
        %vm907 = vcmp.eq.f32.partialorder %v737, 0.0
        %v908 = vand.u32 %v737, 2147483648
        %v909 = vsel %vm907, %v908, %v906
        %v910 = vrsqrt.pop %v739
        %v911 = vmul.f32 %v910, %v739
        %v912 = vmul.f32 %v911, %v910
        %v913 = vmul.f32 0.5, %v912
        %v914 = vsub.f32 1.5, %v913
        %v915 = vmul.f32 %v910, %v914
        %v916 = vmul.f32 %v739, %v915
        %vm917 = vcmp.eq.f32.partialorder %v739, inf
        %v918 = vsel %vm917, %v739, %v916
        %vm919 = vcmp.eq.f32.partialorder %v739, 0.0
        %v920 = vand.u32 %v739, 2147483648
        %v921 = vsel %vm919, %v920, %v918
        %v922 = vrsqrt.pop %v741
        %v923 = vmul.f32 %v922, %v741
        %v924 = vmul.f32 %v923, %v922
        %v925 = vmul.f32 0.5, %v924
        %v926 = vsub.f32 1.5, %v925
        %v927 = vmul.f32 %v922, %v926
        %v928 = vmul.f32 %v741, %v927
        %vm929 = vcmp.eq.f32.partialorder %v741, inf
        %v930 = vsel %vm929, %v741, %v928
        %vm931 = vcmp.eq.f32.partialorder %v741, 0.0
        %v932 = vand.u32 %v741, 2147483648
        %v933 = vsel %vm931, %v932, %v930
        %v934 = vrsqrt.pop %v743
        %v935 = vmul.f32 %v934, %v743
        %v936 = vmul.f32 %v935, %v934
        %v937 = vmul.f32 0.5, %v936
        %v938 = vsub.f32 1.5, %v937
        %v939 = vmul.f32 %v934, %v938
        %v940 = vmul.f32 %v743, %v939
        %vm941 = vcmp.eq.f32.partialorder %v743, inf
        %v942 = vsel %vm941, %v743, %v940
        %vm943 = vcmp.eq.f32.partialorder %v743, 0.0
        %v944 = vand.u32 %v743, 2147483648
        %v945 = vsel %vm943, %v944, %v942
        %v946 = vrsqrt.pop %v745
        %v947 = vmul.f32 %v946, %v745
        %v948 = vmul.f32 %v947, %v946
        %v949 = vmul.f32 0.5, %v948
        %v950 = vsub.f32 1.5, %v949
        %v951 = vmul.f32 %v946, %v950
        %v952 = vmul.f32 %v745, %v951
        %vm953 = vcmp.eq.f32.partialorder %v745, inf
        %v954 = vsel %vm953, %v745, %v952
        %vm955 = vcmp.eq.f32.partialorder %v745, 0.0
        %v956 = vand.u32 %v745, 2147483648
        %v957 = vsel %vm955, %v956, %v954
        %v958 = vrsqrt.pop %v747
        %v959 = vmul.f32 %v958, %v747
        %v960 = vmul.f32 %v959, %v958
        %v961 = vmul.f32 0.5, %v960
        %v962 = vsub.f32 1.5, %v961
        %v963 = vmul.f32 %v958, %v962
        %v964 = vmul.f32 %v747, %v963
        %vm965 = vcmp.eq.f32.partialorder %v747, inf
        %v966 = vsel %vm965, %v747, %v964
        %vm967 = vcmp.eq.f32.partialorder %v747, 0.0
        %v968 = vand.u32 %v747, 2147483648
        %v969 = vsel %vm967, %v968, %v966
        %v970 = vrsqrt.pop %v749
        %v971 = vmul.f32 %v970, %v749
        %v972 = vmul.f32 %v971, %v970
        %v973 = vmul.f32 0.5, %v972
        %v974 = vsub.f32 1.5, %v973
        %v975 = vmul.f32 %v970, %v974
        %v976 = vmul.f32 %v749, %v975
        %vm977 = vcmp.eq.f32.partialorder %v749, inf
        %v978 = vsel %vm977, %v749, %v976
        %vm979 = vcmp.eq.f32.partialorder %v749, 0.0
        %v980 = vand.u32 %v749, 2147483648
        %v981 = vsel %vm979, %v980, %v978
        %v982 = vrsqrt.pop %v751
        %v983 = vmul.f32 %v982, %v751
        %v984 = vmul.f32 %v983, %v982
        %v985 = vmul.f32 0.5, %v984
        %v986 = vsub.f32 1.5, %v985
        %v987 = vmul.f32 %v982, %v986
        %v988 = vmul.f32 %v751, %v987
        %vm989 = vcmp.eq.f32.partialorder %v751, inf
        %v990 = vsel %vm989, %v751, %v988
        %vm991 = vcmp.eq.f32.partialorder %v751, 0.0
        %v992 = vand.u32 %v751, 2147483648
        %v993 = vsel %vm991, %v992, %v990
        %v994 = vrsqrt.pop %v753
        %v995 = vmul.f32 %v994, %v753
        %v996 = vmul.f32 %v995, %v994
        %v997 = vmul.f32 0.5, %v996
        %v998 = vsub.f32 1.5, %v997
        %v999 = vmul.f32 %v994, %v998
        %v1000 = vmul.f32 %v753, %v999
        %vm1001 = vcmp.eq.f32.partialorder %v753, inf
        %v1002 = vsel %vm1001, %v753, %v1000
        %vm1003 = vcmp.eq.f32.partialorder %v753, 0.0
        %v1004 = vand.u32 %v753, 2147483648
        %v1005 = vsel %vm1003, %v1004, %v1002
        %v1006 = vrsqrt.pop %v755
        %v1007 = vmul.f32 %v1006, %v755
        %v1008 = vmul.f32 %v1007, %v1006
        %v1009 = vmul.f32 0.5, %v1008
        %v1010 = vsub.f32 1.5, %v1009
        %v1011 = vmul.f32 %v1006, %v1010
        %v1012 = vmul.f32 %v755, %v1011
        %vm1013 = vcmp.eq.f32.partialorder %v755, inf
        %v1014 = vsel %vm1013, %v755, %v1012
        %vm1015 = vcmp.eq.f32.partialorder %v755, 0.0
        %v1016 = vand.u32 %v755, 2147483648
        %v1017 = vsel %vm1015, %v1016, %v1014
        %v1018 = vrsqrt.pop %v757
        %v1019 = vmul.f32 %v1018, %v757
        %v1020 = vmul.f32 %v1019, %v1018
        %v1021 = vmul.f32 0.5, %v1020
        %v1022 = vsub.f32 1.5, %v1021
        %v1023 = vmul.f32 %v1018, %v1022
        %v1024 = vmul.f32 %v757, %v1023
        %vm1025 = vcmp.eq.f32.partialorder %v757, inf
        %v1026 = vsel %vm1025, %v757, %v1024
        %vm1027 = vcmp.eq.f32.partialorder %v757, 0.0
        %v1028 = vand.u32 %v757, 2147483648
        %v1029 = vsel %vm1027, %v1028, %v1026
        %v1030 = vadd.f32 %v849, 1e-08
        %v1031 = vadd.f32 %v861, 1e-08
        %v1032 = vadd.f32 %v873, 1e-08
        %v1033 = vadd.f32 %v885, 1e-08
        %v1034 = vadd.f32 %v897, 1e-08
        %v1035 = vadd.f32 %v909, 1e-08
        %v1036 = vadd.f32 %v921, 1e-08
        %v1037 = vadd.f32 %v933, 1e-08
        %v1038 = vadd.f32 %v945, 1e-08
        %v1039 = vadd.f32 %v957, 1e-08
        %v1040 = vadd.f32 %v969, 1e-08
        %v1041 = vadd.f32 %v981, 1e-08
        %v1042 = vadd.f32 %v993, 1e-08
        %v1043 = vadd.f32 %v1005, 1e-08
        %v1044 = vadd.f32 %v1017, 1e-08
        %v1045 = vadd.f32 %v1029, 1e-08
        %v1046 = vrcp.pop %v1030
        %v1047 = vrcp.pop %v1031
        %v1048 = vrcp.pop %v1032
        %v1049 = vrcp.pop %v1033
        %v1050 = vrcp.pop %v1034
        %v1051 = vrcp.pop %v1035
        %v1052 = vrcp.pop %v1036
        %v1053 = vrcp.pop %v1037
        %v1054 = vrcp.pop %v1038
        %v1055 = vrcp.pop %v1039
        %v1056 = vrcp.pop %v1040
        %v1057 = vrcp.pop %v1041
        %v1058 = vrcp.pop %v1042
        %v1059 = vrcp.pop %v1043
        %v1060 = vrcp.pop %v1044
        %v1061 = vrcp.pop %v1045
        %v1062 = vadd.f32 %v1046, 0.0
        %v1063 = vadd.f32 %v1047, 0.0
        %v1064 = vadd.f32 %v1048, 0.0
        %v1065 = vadd.f32 %v1049, 0.0
        %v1066 = vadd.f32 %v1050, 0.0
        %v1067 = vadd.f32 %v1051, 0.0
        %v1068 = vadd.f32 %v1052, 0.0
        %v1069 = vadd.f32 %v1053, 0.0
        %v1070 = vadd.f32 %v1054, 0.0
        %v1071 = vadd.f32 %v1055, 0.0
        %v1072 = vadd.f32 %v1056, 0.0
        %v1073 = vadd.f32 %v1057, 0.0
        %v1074 = vadd.f32 %v1058, 0.0
        %v1075 = vadd.f32 %v1059, 0.0
        %v1076 = vadd.f32 %v1060, 0.0
        %v1077 = vadd.f32 %v1061, 0.0
        %v1078 = vsel %vm822, %v1046, 0.0
        %v1079 = vsel %vm823, %v1047, 0.0
        %v1080 = vsel %vm824, %v1048, 0.0
        %v1081 = vsel %vm825, %v1049, 0.0
        %v1082 = vsel %vm826, %v1050, 0.0
        %v1083 = vsel %vm827, %v1051, 0.0
        %v1084 = vsel %vm828, %v1052, 0.0
        %v1085 = vsel %vm829, %v1053, 0.0
        %v1086 = vsel %vm830, %v1054, 0.0
        %v1087 = vsel %vm831, %v1055, 0.0
        %v1088 = vsel %vm832, %v1056, 0.0
        %v1089 = vsel %vm833, %v1057, 0.0
        %v1090 = vsel %vm834, %v1058, 0.0
        %v1091 = vsel %vm835, %v1059, 0.0
        %v1092 = vsel %vm836, %v1060, 0.0
        %v1093 = vsel %vm837, %v1061, 0.0
        %v1094 = vadd.f32 %v1078, 0.0
        %v1095 = vadd.f32 %v1079, 0.0
        %v1096 = vadd.f32 %v1080, 0.0
        %v1097 = vadd.f32 %v1081, 0.0
        %v1098 = vadd.f32 %v1082, 0.0
        %v1099 = vadd.f32 %v1083, 0.0
        %v1100 = vadd.f32 %v1084, 0.0
        %v1101 = vadd.f32 %v1085, 0.0
        %v1102 = vadd.f32 %v1086, 0.0
        %v1103 = vadd.f32 %v1087, 0.0
        %v1104 = vadd.f32 %v1088, 0.0
        %v1105 = vadd.f32 %v1089, 0.0
        %v1106 = vadd.f32 %v1090, 0.0
        %v1107 = vadd.f32 %v1091, 0.0
        %v1108 = vadd.f32 %v1092, 0.0
        %v1109 = vadd.f32 %v1093, 0.0
        %v1110 = vsel %vm822, 1e+30, %v707
        %v1111 = vsel %vm823, 1e+30, %v708
        %v1112 = vsel %vm824, 1e+30, %v709
        %v1113 = vsel %vm825, 1e+30, %v710
        %v1114 = vsel %vm826, 1e+30, %v711
        %v1115 = vsel %vm827, 1e+30, %v712
        %v1116 = vsel %vm828, 1e+30, %v713
        %v1117 = vsel %vm829, 1e+30, %v714
        %v1118 = vsel %vm830, 1e+30, %v715
        %v1119 = vsel %vm831, 1e+30, %v716
        %v1120 = vsel %vm832, 1e+30, %v717
        %v1121 = vsel %vm833, 1e+30, %v718
        %v1122 = vsel %vm834, 1e+30, %v719
        %v1123 = vsel %vm835, 1e+30, %v720
        %v1124 = vsel %vm836, 1e+30, %v721
        %v1125 = vsel %vm837, 1e+30, %v722
        %1126 = vmin.xlane.f32.xlu0 %v1110
        %v1127 = vpop.xlane.xlu0 %1126
        %1128 = vmin.xlane.f32.xlu0 %v1111
        %v1129 = vpop.xlane.xlu0 %1128
        %1130 = vmin.xlane.f32.xlu0 %v1112
        %v1131 = vpop.xlane.xlu0 %1130
        %1132 = vmin.xlane.f32.xlu0 %v1113
        %v1133 = vpop.xlane.xlu0 %1132
        %1134 = vmin.xlane.f32.xlu0 %v1114
        %v1135 = vpop.xlane.xlu0 %1134
        %1136 = vmin.xlane.f32.xlu0 %v1115
        %v1137 = vpop.xlane.xlu0 %1136
        %1138 = vmin.xlane.f32.xlu0 %v1116
        %v1139 = vpop.xlane.xlu0 %1138
        %1140 = vmin.xlane.f32.xlu0 %v1117
        %v1141 = vpop.xlane.xlu0 %1140
        %1142 = vmin.xlane.f32.xlu0 %v1118
        %v1143 = vpop.xlane.xlu0 %1142
        %1144 = vmin.xlane.f32.xlu0 %v1119
        %v1145 = vpop.xlane.xlu0 %1144
        %1146 = vmin.xlane.f32.xlu0 %v1120
        %v1147 = vpop.xlane.xlu0 %1146
        %1148 = vmin.xlane.f32.xlu0 %v1121
        %v1149 = vpop.xlane.xlu0 %1148
        %1150 = vmin.xlane.f32.xlu0 %v1122
        %v1151 = vpop.xlane.xlu0 %1150
        %1152 = vmin.xlane.f32.xlu0 %v1123
        %v1153 = vpop.xlane.xlu0 %1152
        %1154 = vmin.xlane.f32.xlu0 %v1124
        %v1155 = vpop.xlane.xlu0 %1154
        %1156 = vmin.xlane.f32.xlu0 %v1125
        %v1157 = vpop.xlane.xlu0 %1156
        %vm1158 = vcmp.le.f32.partialorder %v1110, %v1127
        %vm1159 = vcmp.le.f32.partialorder %v1111, %v1129
        %vm1160 = vcmp.le.f32.partialorder %v1112, %v1131
        %vm1161 = vcmp.le.f32.partialorder %v1113, %v1133
        %vm1162 = vcmp.le.f32.partialorder %v1114, %v1135
        %vm1163 = vcmp.le.f32.partialorder %v1115, %v1137
        %vm1164 = vcmp.le.f32.partialorder %v1116, %v1139
        %vm1165 = vcmp.le.f32.partialorder %v1117, %v1141
        %vm1166 = vcmp.le.f32.partialorder %v1118, %v1143
        %vm1167 = vcmp.le.f32.partialorder %v1119, %v1145
        %vm1168 = vcmp.le.f32.partialorder %v1120, %v1147
        %vm1169 = vcmp.le.f32.partialorder %v1121, %v1149
        %vm1170 = vcmp.le.f32.partialorder %v1122, %v1151
        %vm1171 = vcmp.le.f32.partialorder %v1123, %v1153
        %vm1172 = vcmp.le.f32.partialorder %v1124, %v1155
        %vm1173 = vcmp.le.f32.partialorder %v1125, %v1157
        %v1174 = vsel %vm1158, %v725, 1e+30
        %v1175 = vsel %vm1159, %v725, 1e+30
        %v1176 = vsel %vm1160, %v725, 1e+30
        %v1177 = vsel %vm1161, %v725, 1e+30
        %v1178 = vsel %vm1162, %v725, 1e+30
        %v1179 = vsel %vm1163, %v725, 1e+30
        %v1180 = vsel %vm1164, %v725, 1e+30
        %v1181 = vsel %vm1165, %v725, 1e+30
        %v1182 = vsel %vm1166, %v725, 1e+30
        %v1183 = vsel %vm1167, %v725, 1e+30
        %v1184 = vsel %vm1168, %v725, 1e+30
        %v1185 = vsel %vm1169, %v725, 1e+30
        %v1186 = vsel %vm1170, %v725, 1e+30
        %v1187 = vsel %vm1171, %v725, 1e+30
        %v1188 = vsel %vm1172, %v725, 1e+30
        %v1189 = vsel %vm1173, %v725, 1e+30
        %1190 = vmin.xlane.f32.xlu0 %v1174
        %v1191 = vpop.xlane.xlu0 %1190
        %1192 = vmin.xlane.f32.xlu0 %v1175
        %v1193 = vpop.xlane.xlu0 %1192
        %1194 = vmin.xlane.f32.xlu0 %v1176
        %v1195 = vpop.xlane.xlu0 %1194
        %1196 = vmin.xlane.f32.xlu0 %v1177
        %v1197 = vpop.xlane.xlu0 %1196
        %1198 = vmin.xlane.f32.xlu0 %v1178
        %v1199 = vpop.xlane.xlu0 %1198
        %1200 = vmin.xlane.f32.xlu0 %v1179
        %v1201 = vpop.xlane.xlu0 %1200
        %1202 = vmin.xlane.f32.xlu0 %v1180
        %v1203 = vpop.xlane.xlu0 %1202
        %1204 = vmin.xlane.f32.xlu0 %v1181
        %v1205 = vpop.xlane.xlu0 %1204
        %1206 = vmin.xlane.f32.xlu0 %v1182
        %v1207 = vpop.xlane.xlu0 %1206
        %1208 = vmin.xlane.f32.xlu0 %v1183
        %v1209 = vpop.xlane.xlu0 %1208
        %1210 = vmin.xlane.f32.xlu0 %v1184
        %v1211 = vpop.xlane.xlu0 %1210
        %1212 = vmin.xlane.f32.xlu0 %v1185
        %v1213 = vpop.xlane.xlu0 %1212
        %1214 = vmin.xlane.f32.xlu0 %v1186
        %v1215 = vpop.xlane.xlu0 %1214
        %1216 = vmin.xlane.f32.xlu0 %v1187
        %v1217 = vpop.xlane.xlu0 %1216
        %1218 = vmin.xlane.f32.xlu0 %v1188
        %v1219 = vpop.xlane.xlu0 %1218
        %1220 = vmin.xlane.f32.xlu0 %v1189
        %v1221 = vpop.xlane.xlu0 %1220
        %vm1222 = vcmp.eq.f32.partialorder %v725, %v1191
        %vm1223 = vcmp.eq.f32.partialorder %v725, %v1193
        %vm1224 = vcmp.eq.f32.partialorder %v725, %v1195
        %vm1225 = vcmp.eq.f32.partialorder %v725, %v1197
        %vm1226 = vcmp.eq.f32.partialorder %v725, %v1199
        %vm1227 = vcmp.eq.f32.partialorder %v725, %v1201
        %vm1228 = vcmp.eq.f32.partialorder %v725, %v1203
        %vm1229 = vcmp.eq.f32.partialorder %v725, %v1205
        %vm1230 = vcmp.eq.f32.partialorder %v725, %v1207
        %vm1231 = vcmp.eq.f32.partialorder %v725, %v1209
        %vm1232 = vcmp.eq.f32.partialorder %v725, %v1211
        %vm1233 = vcmp.eq.f32.partialorder %v725, %v1213
        %vm1234 = vcmp.eq.f32.partialorder %v725, %v1215
        %vm1235 = vcmp.eq.f32.partialorder %v725, %v1217
        %vm1236 = vcmp.eq.f32.partialorder %v725, %v1219
        %vm1237 = vcmp.eq.f32.partialorder %v725, %v1221
        %v1238 = vrsqrt.pop %v1127
        %v1239 = vmul.f32 %v1238, %v1127
        %v1240 = vmul.f32 %v1239, %v1238
        %v1241 = vmul.f32 0.5, %v1240
        %v1242 = vsub.f32 1.5, %v1241
        %v1243 = vmul.f32 %v1238, %v1242
        %v1244 = vmul.f32 %v1127, %v1243
        %vm1245 = vcmp.eq.f32.partialorder %v1127, inf
        %v1246 = vsel %vm1245, %v1127, %v1244
        %vm1247 = vcmp.eq.f32.partialorder %v1127, 0.0
        %v1248 = vand.u32 %v1127, 2147483648
        %v1249 = vsel %vm1247, %v1248, %v1246
        %v1250 = vrsqrt.pop %v1129
        %v1251 = vmul.f32 %v1250, %v1129
        %v1252 = vmul.f32 %v1251, %v1250
        %v1253 = vmul.f32 0.5, %v1252
        %v1254 = vsub.f32 1.5, %v1253
        %v1255 = vmul.f32 %v1250, %v1254
        %v1256 = vmul.f32 %v1129, %v1255
        %vm1257 = vcmp.eq.f32.partialorder %v1129, inf
        %v1258 = vsel %vm1257, %v1129, %v1256
        %vm1259 = vcmp.eq.f32.partialorder %v1129, 0.0
        %v1260 = vand.u32 %v1129, 2147483648
        %v1261 = vsel %vm1259, %v1260, %v1258
        %v1262 = vrsqrt.pop %v1131
        %v1263 = vmul.f32 %v1262, %v1131
        %v1264 = vmul.f32 %v1263, %v1262
        %v1265 = vmul.f32 0.5, %v1264
        %v1266 = vsub.f32 1.5, %v1265
        %v1267 = vmul.f32 %v1262, %v1266
        %v1268 = vmul.f32 %v1131, %v1267
        %vm1269 = vcmp.eq.f32.partialorder %v1131, inf
        %v1270 = vsel %vm1269, %v1131, %v1268
        %vm1271 = vcmp.eq.f32.partialorder %v1131, 0.0
        %v1272 = vand.u32 %v1131, 2147483648
        %v1273 = vsel %vm1271, %v1272, %v1270
        %v1274 = vrsqrt.pop %v1133
        %v1275 = vmul.f32 %v1274, %v1133
        %v1276 = vmul.f32 %v1275, %v1274
        %v1277 = vmul.f32 0.5, %v1276
        %v1278 = vsub.f32 1.5, %v1277
        %v1279 = vmul.f32 %v1274, %v1278
        %v1280 = vmul.f32 %v1133, %v1279
        %vm1281 = vcmp.eq.f32.partialorder %v1133, inf
        %v1282 = vsel %vm1281, %v1133, %v1280
        %vm1283 = vcmp.eq.f32.partialorder %v1133, 0.0
        %v1284 = vand.u32 %v1133, 2147483648
        %v1285 = vsel %vm1283, %v1284, %v1282
        %v1286 = vrsqrt.pop %v1135
        %v1287 = vmul.f32 %v1286, %v1135
        %v1288 = vmul.f32 %v1287, %v1286
        %v1289 = vmul.f32 0.5, %v1288
        %v1290 = vsub.f32 1.5, %v1289
        %v1291 = vmul.f32 %v1286, %v1290
        %v1292 = vmul.f32 %v1135, %v1291
        %vm1293 = vcmp.eq.f32.partialorder %v1135, inf
        %v1294 = vsel %vm1293, %v1135, %v1292
        %vm1295 = vcmp.eq.f32.partialorder %v1135, 0.0
        %v1296 = vand.u32 %v1135, 2147483648
        %v1297 = vsel %vm1295, %v1296, %v1294
        %v1298 = vrsqrt.pop %v1137
        %v1299 = vmul.f32 %v1298, %v1137
        %v1300 = vmul.f32 %v1299, %v1298
        %v1301 = vmul.f32 0.5, %v1300
        %v1302 = vsub.f32 1.5, %v1301
        %v1303 = vmul.f32 %v1298, %v1302
        %v1304 = vmul.f32 %v1137, %v1303
        %vm1305 = vcmp.eq.f32.partialorder %v1137, inf
        %v1306 = vsel %vm1305, %v1137, %v1304
        %vm1307 = vcmp.eq.f32.partialorder %v1137, 0.0
        %v1308 = vand.u32 %v1137, 2147483648
        %v1309 = vsel %vm1307, %v1308, %v1306
        %v1310 = vrsqrt.pop %v1139
        %v1311 = vmul.f32 %v1310, %v1139
        %v1312 = vmul.f32 %v1311, %v1310
        %v1313 = vmul.f32 0.5, %v1312
        %v1314 = vsub.f32 1.5, %v1313
        %v1315 = vmul.f32 %v1310, %v1314
        %v1316 = vmul.f32 %v1139, %v1315
        %vm1317 = vcmp.eq.f32.partialorder %v1139, inf
        %v1318 = vsel %vm1317, %v1139, %v1316
        %vm1319 = vcmp.eq.f32.partialorder %v1139, 0.0
        %v1320 = vand.u32 %v1139, 2147483648
        %v1321 = vsel %vm1319, %v1320, %v1318
        %v1322 = vrsqrt.pop %v1141
        %v1323 = vmul.f32 %v1322, %v1141
        %v1324 = vmul.f32 %v1323, %v1322
        %v1325 = vmul.f32 0.5, %v1324
        %v1326 = vsub.f32 1.5, %v1325
        %v1327 = vmul.f32 %v1322, %v1326
        %v1328 = vmul.f32 %v1141, %v1327
        %vm1329 = vcmp.eq.f32.partialorder %v1141, inf
        %v1330 = vsel %vm1329, %v1141, %v1328
        %vm1331 = vcmp.eq.f32.partialorder %v1141, 0.0
        %v1332 = vand.u32 %v1141, 2147483648
        %v1333 = vsel %vm1331, %v1332, %v1330
        %v1334 = vrsqrt.pop %v1143
        %v1335 = vmul.f32 %v1334, %v1143
        %v1336 = vmul.f32 %v1335, %v1334
        %v1337 = vmul.f32 0.5, %v1336
        %v1338 = vsub.f32 1.5, %v1337
        %v1339 = vmul.f32 %v1334, %v1338
        %v1340 = vmul.f32 %v1143, %v1339
        %vm1341 = vcmp.eq.f32.partialorder %v1143, inf
        %v1342 = vsel %vm1341, %v1143, %v1340
        %vm1343 = vcmp.eq.f32.partialorder %v1143, 0.0
        %v1344 = vand.u32 %v1143, 2147483648
        %v1345 = vsel %vm1343, %v1344, %v1342
        %v1346 = vrsqrt.pop %v1145
        %v1347 = vmul.f32 %v1346, %v1145
        %v1348 = vmul.f32 %v1347, %v1346
        %v1349 = vmul.f32 0.5, %v1348
        %v1350 = vsub.f32 1.5, %v1349
        %v1351 = vmul.f32 %v1346, %v1350
        %v1352 = vmul.f32 %v1145, %v1351
        %vm1353 = vcmp.eq.f32.partialorder %v1145, inf
        %v1354 = vsel %vm1353, %v1145, %v1352
        %vm1355 = vcmp.eq.f32.partialorder %v1145, 0.0
        %v1356 = vand.u32 %v1145, 2147483648
        %v1357 = vsel %vm1355, %v1356, %v1354
        %v1358 = vrsqrt.pop %v1147
        %v1359 = vmul.f32 %v1358, %v1147
        %v1360 = vmul.f32 %v1359, %v1358
        %v1361 = vmul.f32 0.5, %v1360
        %v1362 = vsub.f32 1.5, %v1361
        %v1363 = vmul.f32 %v1358, %v1362
        %v1364 = vmul.f32 %v1147, %v1363
        %vm1365 = vcmp.eq.f32.partialorder %v1147, inf
        %v1366 = vsel %vm1365, %v1147, %v1364
        %vm1367 = vcmp.eq.f32.partialorder %v1147, 0.0
        %v1368 = vand.u32 %v1147, 2147483648
        %v1369 = vsel %vm1367, %v1368, %v1366
        %v1370 = vrsqrt.pop %v1149
        %v1371 = vmul.f32 %v1370, %v1149
        %v1372 = vmul.f32 %v1371, %v1370
        %v1373 = vmul.f32 0.5, %v1372
        %v1374 = vsub.f32 1.5, %v1373
        %v1375 = vmul.f32 %v1370, %v1374
        %v1376 = vmul.f32 %v1149, %v1375
        %vm1377 = vcmp.eq.f32.partialorder %v1149, inf
        %v1378 = vsel %vm1377, %v1149, %v1376
        %vm1379 = vcmp.eq.f32.partialorder %v1149, 0.0
        %v1380 = vand.u32 %v1149, 2147483648
        %v1381 = vsel %vm1379, %v1380, %v1378
        %v1382 = vrsqrt.pop %v1151
        %v1383 = vmul.f32 %v1382, %v1151
        %v1384 = vmul.f32 %v1383, %v1382
        %v1385 = vmul.f32 0.5, %v1384
        %v1386 = vsub.f32 1.5, %v1385
        %v1387 = vmul.f32 %v1382, %v1386
        %v1388 = vmul.f32 %v1151, %v1387
        %vm1389 = vcmp.eq.f32.partialorder %v1151, inf
        %v1390 = vsel %vm1389, %v1151, %v1388
        %vm1391 = vcmp.eq.f32.partialorder %v1151, 0.0
        %v1392 = vand.u32 %v1151, 2147483648
        %v1393 = vsel %vm1391, %v1392, %v1390
        %v1394 = vrsqrt.pop %v1153
        %v1395 = vmul.f32 %v1394, %v1153
        %v1396 = vmul.f32 %v1395, %v1394
        %v1397 = vmul.f32 0.5, %v1396
        %v1398 = vsub.f32 1.5, %v1397
        %v1399 = vmul.f32 %v1394, %v1398
        %v1400 = vmul.f32 %v1153, %v1399
        %vm1401 = vcmp.eq.f32.partialorder %v1153, inf
        %v1402 = vsel %vm1401, %v1153, %v1400
        %vm1403 = vcmp.eq.f32.partialorder %v1153, 0.0
        %v1404 = vand.u32 %v1153, 2147483648
        %v1405 = vsel %vm1403, %v1404, %v1402
        %v1406 = vrsqrt.pop %v1155
        %v1407 = vmul.f32 %v1406, %v1155
        %v1408 = vmul.f32 %v1407, %v1406
        %v1409 = vmul.f32 0.5, %v1408
        %v1410 = vsub.f32 1.5, %v1409
        %v1411 = vmul.f32 %v1406, %v1410
        %v1412 = vmul.f32 %v1155, %v1411
        %vm1413 = vcmp.eq.f32.partialorder %v1155, inf
        %v1414 = vsel %vm1413, %v1155, %v1412
        %vm1415 = vcmp.eq.f32.partialorder %v1155, 0.0
        %v1416 = vand.u32 %v1155, 2147483648
        %v1417 = vsel %vm1415, %v1416, %v1414
        %v1418 = vrsqrt.pop %v1157
        %v1419 = vmul.f32 %v1418, %v1157
        %v1420 = vmul.f32 %v1419, %v1418
        %v1421 = vmul.f32 0.5, %v1420
        %v1422 = vsub.f32 1.5, %v1421
        %v1423 = vmul.f32 %v1418, %v1422
        %v1424 = vmul.f32 %v1157, %v1423
        %vm1425 = vcmp.eq.f32.partialorder %v1157, inf
        %v1426 = vsel %vm1425, %v1157, %v1424
        %vm1427 = vcmp.eq.f32.partialorder %v1157, 0.0
        %v1428 = vand.u32 %v1157, 2147483648
        %v1429 = vsel %vm1427, %v1428, %v1426
        %v1430 = vadd.f32 %v1249, 1e-08
        %v1431 = vadd.f32 %v1261, 1e-08
        %v1432 = vadd.f32 %v1273, 1e-08
        %v1433 = vadd.f32 %v1285, 1e-08
        %v1434 = vadd.f32 %v1297, 1e-08
        %v1435 = vadd.f32 %v1309, 1e-08
        %v1436 = vadd.f32 %v1321, 1e-08
        %v1437 = vadd.f32 %v1333, 1e-08
        %v1438 = vadd.f32 %v1345, 1e-08
        %v1439 = vadd.f32 %v1357, 1e-08
        %v1440 = vadd.f32 %v1369, 1e-08
        %v1441 = vadd.f32 %v1381, 1e-08
        %v1442 = vadd.f32 %v1393, 1e-08
        %v1443 = vadd.f32 %v1405, 1e-08
        %v1444 = vadd.f32 %v1417, 1e-08
        %v1445 = vadd.f32 %v1429, 1e-08
        %v1446 = vrcp.pop %v1430
        %v1447 = vrcp.pop %v1431
        %v1448 = vrcp.pop %v1432
        %v1449 = vrcp.pop %v1433
        %v1450 = vrcp.pop %v1434
        %v1451 = vrcp.pop %v1435
        %v1452 = vrcp.pop %v1436
        %v1453 = vrcp.pop %v1437
        %v1454 = vrcp.pop %v1438
        %v1455 = vrcp.pop %v1439
        %v1456 = vrcp.pop %v1440
        %v1457 = vrcp.pop %v1441
        %v1458 = vrcp.pop %v1442
        %v1459 = vrcp.pop %v1443
        %v1460 = vrcp.pop %v1444
        %v1461 = vrcp.pop %v1445
        %v1462 = vadd.f32 %v1062, %v1446
        %v1463 = vadd.f32 %v1063, %v1447
        %v1464 = vadd.f32 %v1064, %v1448
        %v1465 = vadd.f32 %v1065, %v1449
        %v1466 = vadd.f32 %v1066, %v1450
        %v1467 = vadd.f32 %v1067, %v1451
        %v1468 = vadd.f32 %v1068, %v1452
        %v1469 = vadd.f32 %v1069, %v1453
        %v1470 = vadd.f32 %v1070, %v1454
        %v1471 = vadd.f32 %v1071, %v1455
        %v1472 = vadd.f32 %v1072, %v1456
        %v1473 = vadd.f32 %v1073, %v1457
        %v1474 = vadd.f32 %v1074, %v1458
        %v1475 = vadd.f32 %v1075, %v1459
        %v1476 = vadd.f32 %v1076, %v1460
        %v1477 = vadd.f32 %v1077, %v1461
        %v1478 = vsel %vm1222, %v1446, 0.0
        %v1479 = vsel %vm1223, %v1447, 0.0
        %v1480 = vsel %vm1224, %v1448, 0.0
        %v1481 = vsel %vm1225, %v1449, 0.0
        %v1482 = vsel %vm1226, %v1450, 0.0
        %v1483 = vsel %vm1227, %v1451, 0.0
        %v1484 = vsel %vm1228, %v1452, 0.0
        %v1485 = vsel %vm1229, %v1453, 0.0
        %v1486 = vsel %vm1230, %v1454, 0.0
        %v1487 = vsel %vm1231, %v1455, 0.0
        %v1488 = vsel %vm1232, %v1456, 0.0
        %v1489 = vsel %vm1233, %v1457, 0.0
        %v1490 = vsel %vm1234, %v1458, 0.0
        %v1491 = vsel %vm1235, %v1459, 0.0
        %v1492 = vsel %vm1236, %v1460, 0.0
        %v1493 = vsel %vm1237, %v1461, 0.0
        %v1494 = vadd.f32 %v1094, %v1478
        %v1495 = vadd.f32 %v1095, %v1479
        %v1496 = vadd.f32 %v1096, %v1480
        %v1497 = vadd.f32 %v1097, %v1481
        %v1498 = vadd.f32 %v1098, %v1482
        %v1499 = vadd.f32 %v1099, %v1483
        %v1500 = vadd.f32 %v1100, %v1484
        %v1501 = vadd.f32 %v1101, %v1485
        %v1502 = vadd.f32 %v1102, %v1486
        %v1503 = vadd.f32 %v1103, %v1487
        %v1504 = vadd.f32 %v1104, %v1488
        %v1505 = vadd.f32 %v1105, %v1489
        %v1506 = vadd.f32 %v1106, %v1490
        %v1507 = vadd.f32 %v1107, %v1491
        %v1508 = vadd.f32 %v1108, %v1492
        %v1509 = vadd.f32 %v1109, %v1493
        %v1510 = vsel %vm1222, 1e+30, %v1110
        %v1511 = vsel %vm1223, 1e+30, %v1111
        %v1512 = vsel %vm1224, 1e+30, %v1112
        %v1513 = vsel %vm1225, 1e+30, %v1113
        %v1514 = vsel %vm1226, 1e+30, %v1114
        %v1515 = vsel %vm1227, 1e+30, %v1115
        %v1516 = vsel %vm1228, 1e+30, %v1116
        %v1517 = vsel %vm1229, 1e+30, %v1117
        %v1518 = vsel %vm1230, 1e+30, %v1118
        %v1519 = vsel %vm1231, 1e+30, %v1119
        %v1520 = vsel %vm1232, 1e+30, %v1120
        %v1521 = vsel %vm1233, 1e+30, %v1121
        %v1522 = vsel %vm1234, 1e+30, %v1122
        %v1523 = vsel %vm1235, 1e+30, %v1123
        %v1524 = vsel %vm1236, 1e+30, %v1124
        %v1525 = vsel %vm1237, 1e+30, %v1125
        %1526 = vmin.xlane.f32.xlu0 %v1510
        %v1527 = vpop.xlane.xlu0 %1526
        %1528 = vmin.xlane.f32.xlu0 %v1511
        %v1529 = vpop.xlane.xlu0 %1528
        %1530 = vmin.xlane.f32.xlu0 %v1512
        %v1531 = vpop.xlane.xlu0 %1530
        %1532 = vmin.xlane.f32.xlu0 %v1513
        %v1533 = vpop.xlane.xlu0 %1532
        %1534 = vmin.xlane.f32.xlu0 %v1514
        %v1535 = vpop.xlane.xlu0 %1534
        %1536 = vmin.xlane.f32.xlu0 %v1515
        %v1537 = vpop.xlane.xlu0 %1536
        %1538 = vmin.xlane.f32.xlu0 %v1516
        %v1539 = vpop.xlane.xlu0 %1538
        %1540 = vmin.xlane.f32.xlu0 %v1517
        %v1541 = vpop.xlane.xlu0 %1540
        %1542 = vmin.xlane.f32.xlu0 %v1518
        %v1543 = vpop.xlane.xlu0 %1542
        %1544 = vmin.xlane.f32.xlu0 %v1519
        %v1545 = vpop.xlane.xlu0 %1544
        %1546 = vmin.xlane.f32.xlu0 %v1520
        %v1547 = vpop.xlane.xlu0 %1546
        %1548 = vmin.xlane.f32.xlu0 %v1521
        %v1549 = vpop.xlane.xlu0 %1548
        %1550 = vmin.xlane.f32.xlu0 %v1522
        %v1551 = vpop.xlane.xlu0 %1550
        %1552 = vmin.xlane.f32.xlu0 %v1523
        %v1553 = vpop.xlane.xlu0 %1552
        %1554 = vmin.xlane.f32.xlu0 %v1524
        %v1555 = vpop.xlane.xlu0 %1554
        %1556 = vmin.xlane.f32.xlu0 %v1525
        %v1557 = vpop.xlane.xlu0 %1556
        %vm1558 = vcmp.le.f32.partialorder %v1510, %v1527
        %vm1559 = vcmp.le.f32.partialorder %v1511, %v1529
        %vm1560 = vcmp.le.f32.partialorder %v1512, %v1531
        %vm1561 = vcmp.le.f32.partialorder %v1513, %v1533
        %vm1562 = vcmp.le.f32.partialorder %v1514, %v1535
        %vm1563 = vcmp.le.f32.partialorder %v1515, %v1537
        %vm1564 = vcmp.le.f32.partialorder %v1516, %v1539
        %vm1565 = vcmp.le.f32.partialorder %v1517, %v1541
        %vm1566 = vcmp.le.f32.partialorder %v1518, %v1543
        %vm1567 = vcmp.le.f32.partialorder %v1519, %v1545
        %vm1568 = vcmp.le.f32.partialorder %v1520, %v1547
        %vm1569 = vcmp.le.f32.partialorder %v1521, %v1549
        %vm1570 = vcmp.le.f32.partialorder %v1522, %v1551
        %vm1571 = vcmp.le.f32.partialorder %v1523, %v1553
        %vm1572 = vcmp.le.f32.partialorder %v1524, %v1555
        %vm1573 = vcmp.le.f32.partialorder %v1525, %v1557
        %v1574 = vsel %vm1558, %v725, 1e+30
        %v1575 = vsel %vm1559, %v725, 1e+30
        %v1576 = vsel %vm1560, %v725, 1e+30
        %v1577 = vsel %vm1561, %v725, 1e+30
        %v1578 = vsel %vm1562, %v725, 1e+30
        %v1579 = vsel %vm1563, %v725, 1e+30
        %v1580 = vsel %vm1564, %v725, 1e+30
        %v1581 = vsel %vm1565, %v725, 1e+30
        %v1582 = vsel %vm1566, %v725, 1e+30
        %v1583 = vsel %vm1567, %v725, 1e+30
        %v1584 = vsel %vm1568, %v725, 1e+30
        %v1585 = vsel %vm1569, %v725, 1e+30
        %v1586 = vsel %vm1570, %v725, 1e+30
        %v1587 = vsel %vm1571, %v725, 1e+30
        %v1588 = vsel %vm1572, %v725, 1e+30
        %v1589 = vsel %vm1573, %v725, 1e+30
        %1590 = vmin.xlane.f32.xlu0 %v1574
        %v1591 = vpop.xlane.xlu0 %1590
        %1592 = vmin.xlane.f32.xlu0 %v1575
        %v1593 = vpop.xlane.xlu0 %1592
        %1594 = vmin.xlane.f32.xlu0 %v1576
        %v1595 = vpop.xlane.xlu0 %1594
        %1596 = vmin.xlane.f32.xlu0 %v1577
        %v1597 = vpop.xlane.xlu0 %1596
        %1598 = vmin.xlane.f32.xlu0 %v1578
        %v1599 = vpop.xlane.xlu0 %1598
        %1600 = vmin.xlane.f32.xlu0 %v1579
        %v1601 = vpop.xlane.xlu0 %1600
        %1602 = vmin.xlane.f32.xlu0 %v1580
        %v1603 = vpop.xlane.xlu0 %1602
        %1604 = vmin.xlane.f32.xlu0 %v1581
        %v1605 = vpop.xlane.xlu0 %1604
        %1606 = vmin.xlane.f32.xlu0 %v1582
        %v1607 = vpop.xlane.xlu0 %1606
        %1608 = vmin.xlane.f32.xlu0 %v1583
        %v1609 = vpop.xlane.xlu0 %1608
        %1610 = vmin.xlane.f32.xlu0 %v1584
        %v1611 = vpop.xlane.xlu0 %1610
        %1612 = vmin.xlane.f32.xlu0 %v1585
        %v1613 = vpop.xlane.xlu0 %1612
        %1614 = vmin.xlane.f32.xlu0 %v1586
        %v1615 = vpop.xlane.xlu0 %1614
        %1616 = vmin.xlane.f32.xlu0 %v1587
        %v1617 = vpop.xlane.xlu0 %1616
        %1618 = vmin.xlane.f32.xlu0 %v1588
        %v1619 = vpop.xlane.xlu0 %1618
        %1620 = vmin.xlane.f32.xlu0 %v1589
        %v1621 = vpop.xlane.xlu0 %1620
        %vm1622 = vcmp.eq.f32.partialorder %v725, %v1591
        %vm1623 = vcmp.eq.f32.partialorder %v725, %v1593
        %vm1624 = vcmp.eq.f32.partialorder %v725, %v1595
        %vm1625 = vcmp.eq.f32.partialorder %v725, %v1597
        %vm1626 = vcmp.eq.f32.partialorder %v725, %v1599
        %vm1627 = vcmp.eq.f32.partialorder %v725, %v1601
        %vm1628 = vcmp.eq.f32.partialorder %v725, %v1603
        %vm1629 = vcmp.eq.f32.partialorder %v725, %v1605
        %vm1630 = vcmp.eq.f32.partialorder %v725, %v1607
        %vm1631 = vcmp.eq.f32.partialorder %v725, %v1609
        %vm1632 = vcmp.eq.f32.partialorder %v725, %v1611
        %vm1633 = vcmp.eq.f32.partialorder %v725, %v1613
        %vm1634 = vcmp.eq.f32.partialorder %v725, %v1615
        %vm1635 = vcmp.eq.f32.partialorder %v725, %v1617
        %vm1636 = vcmp.eq.f32.partialorder %v725, %v1619
        %vm1637 = vcmp.eq.f32.partialorder %v725, %v1621
        %v1638 = vrsqrt.pop %v1527
        %v1639 = vmul.f32 %v1638, %v1527
        %v1640 = vmul.f32 %v1639, %v1638
        %v1641 = vmul.f32 0.5, %v1640
        %v1642 = vsub.f32 1.5, %v1641
        %v1643 = vmul.f32 %v1638, %v1642
        %v1644 = vmul.f32 %v1527, %v1643
        %vm1645 = vcmp.eq.f32.partialorder %v1527, inf
        %v1646 = vsel %vm1645, %v1527, %v1644
        %vm1647 = vcmp.eq.f32.partialorder %v1527, 0.0
        %v1648 = vand.u32 %v1527, 2147483648
        %v1649 = vsel %vm1647, %v1648, %v1646
        %v1650 = vrsqrt.pop %v1529
        %v1651 = vmul.f32 %v1650, %v1529
        %v1652 = vmul.f32 %v1651, %v1650
        %v1653 = vmul.f32 0.5, %v1652
        %v1654 = vsub.f32 1.5, %v1653
        %v1655 = vmul.f32 %v1650, %v1654
        %v1656 = vmul.f32 %v1529, %v1655
        %vm1657 = vcmp.eq.f32.partialorder %v1529, inf
        %v1658 = vsel %vm1657, %v1529, %v1656
        %vm1659 = vcmp.eq.f32.partialorder %v1529, 0.0
        %v1660 = vand.u32 %v1529, 2147483648
        %v1661 = vsel %vm1659, %v1660, %v1658
        %v1662 = vrsqrt.pop %v1531
        %v1663 = vmul.f32 %v1662, %v1531
        %v1664 = vmul.f32 %v1663, %v1662
        %v1665 = vmul.f32 0.5, %v1664
        %v1666 = vsub.f32 1.5, %v1665
        %v1667 = vmul.f32 %v1662, %v1666
        %v1668 = vmul.f32 %v1531, %v1667
        %vm1669 = vcmp.eq.f32.partialorder %v1531, inf
        %v1670 = vsel %vm1669, %v1531, %v1668
        %vm1671 = vcmp.eq.f32.partialorder %v1531, 0.0
        %v1672 = vand.u32 %v1531, 2147483648
        %v1673 = vsel %vm1671, %v1672, %v1670
        %v1674 = vrsqrt.pop %v1533
        %v1675 = vmul.f32 %v1674, %v1533
        %v1676 = vmul.f32 %v1675, %v1674
        %v1677 = vmul.f32 0.5, %v1676
        %v1678 = vsub.f32 1.5, %v1677
        %v1679 = vmul.f32 %v1674, %v1678
        %v1680 = vmul.f32 %v1533, %v1679
        %vm1681 = vcmp.eq.f32.partialorder %v1533, inf
        %v1682 = vsel %vm1681, %v1533, %v1680
        %vm1683 = vcmp.eq.f32.partialorder %v1533, 0.0
        %v1684 = vand.u32 %v1533, 2147483648
        %v1685 = vsel %vm1683, %v1684, %v1682
        %v1686 = vrsqrt.pop %v1535
        %v1687 = vmul.f32 %v1686, %v1535
        %v1688 = vmul.f32 %v1687, %v1686
        %v1689 = vmul.f32 0.5, %v1688
        %v1690 = vsub.f32 1.5, %v1689
        %v1691 = vmul.f32 %v1686, %v1690
        %v1692 = vmul.f32 %v1535, %v1691
        %vm1693 = vcmp.eq.f32.partialorder %v1535, inf
        %v1694 = vsel %vm1693, %v1535, %v1692
        %vm1695 = vcmp.eq.f32.partialorder %v1535, 0.0
        %v1696 = vand.u32 %v1535, 2147483648
        %v1697 = vsel %vm1695, %v1696, %v1694
        %v1698 = vrsqrt.pop %v1537
        %v1699 = vmul.f32 %v1698, %v1537
        %v1700 = vmul.f32 %v1699, %v1698
        %v1701 = vmul.f32 0.5, %v1700
        %v1702 = vsub.f32 1.5, %v1701
        %v1703 = vmul.f32 %v1698, %v1702
        %v1704 = vmul.f32 %v1537, %v1703
        %vm1705 = vcmp.eq.f32.partialorder %v1537, inf
        %v1706 = vsel %vm1705, %v1537, %v1704
        %vm1707 = vcmp.eq.f32.partialorder %v1537, 0.0
        %v1708 = vand.u32 %v1537, 2147483648
        %v1709 = vsel %vm1707, %v1708, %v1706
        %v1710 = vrsqrt.pop %v1539
        %v1711 = vmul.f32 %v1710, %v1539
        %v1712 = vmul.f32 %v1711, %v1710
        %v1713 = vmul.f32 0.5, %v1712
        %v1714 = vsub.f32 1.5, %v1713
        %v1715 = vmul.f32 %v1710, %v1714
        %v1716 = vmul.f32 %v1539, %v1715
        %vm1717 = vcmp.eq.f32.partialorder %v1539, inf
        %v1718 = vsel %vm1717, %v1539, %v1716
        %vm1719 = vcmp.eq.f32.partialorder %v1539, 0.0
        %v1720 = vand.u32 %v1539, 2147483648
        %v1721 = vsel %vm1719, %v1720, %v1718
        %v1722 = vrsqrt.pop %v1541
        %v1723 = vmul.f32 %v1722, %v1541
        %v1724 = vmul.f32 %v1723, %v1722
        %v1725 = vmul.f32 0.5, %v1724
        %v1726 = vsub.f32 1.5, %v1725
        %v1727 = vmul.f32 %v1722, %v1726
        %v1728 = vmul.f32 %v1541, %v1727
        %vm1729 = vcmp.eq.f32.partialorder %v1541, inf
        %v1730 = vsel %vm1729, %v1541, %v1728
        %vm1731 = vcmp.eq.f32.partialorder %v1541, 0.0
        %v1732 = vand.u32 %v1541, 2147483648
        %v1733 = vsel %vm1731, %v1732, %v1730
        %v1734 = vrsqrt.pop %v1543
        %v1735 = vmul.f32 %v1734, %v1543
        %v1736 = vmul.f32 %v1735, %v1734
        %v1737 = vmul.f32 0.5, %v1736
        %v1738 = vsub.f32 1.5, %v1737
        %v1739 = vmul.f32 %v1734, %v1738
        %v1740 = vmul.f32 %v1543, %v1739
        %vm1741 = vcmp.eq.f32.partialorder %v1543, inf
        %v1742 = vsel %vm1741, %v1543, %v1740
        %vm1743 = vcmp.eq.f32.partialorder %v1543, 0.0
        %v1744 = vand.u32 %v1543, 2147483648
        %v1745 = vsel %vm1743, %v1744, %v1742
        %v1746 = vrsqrt.pop %v1545
        %v1747 = vmul.f32 %v1746, %v1545
        %v1748 = vmul.f32 %v1747, %v1746
        %v1749 = vmul.f32 0.5, %v1748
        %v1750 = vsub.f32 1.5, %v1749
        %v1751 = vmul.f32 %v1746, %v1750
        %v1752 = vmul.f32 %v1545, %v1751
        %vm1753 = vcmp.eq.f32.partialorder %v1545, inf
        %v1754 = vsel %vm1753, %v1545, %v1752
        %vm1755 = vcmp.eq.f32.partialorder %v1545, 0.0
        %v1756 = vand.u32 %v1545, 2147483648
        %v1757 = vsel %vm1755, %v1756, %v1754
        %v1758 = vrsqrt.pop %v1547
        %v1759 = vmul.f32 %v1758, %v1547
        %v1760 = vmul.f32 %v1759, %v1758
        %v1761 = vmul.f32 0.5, %v1760
        %v1762 = vsub.f32 1.5, %v1761
        %v1763 = vmul.f32 %v1758, %v1762
        %v1764 = vmul.f32 %v1547, %v1763
        %vm1765 = vcmp.eq.f32.partialorder %v1547, inf
        %v1766 = vsel %vm1765, %v1547, %v1764
        %vm1767 = vcmp.eq.f32.partialorder %v1547, 0.0
        %v1768 = vand.u32 %v1547, 2147483648
        %v1769 = vsel %vm1767, %v1768, %v1766
        %v1770 = vrsqrt.pop %v1549
        %v1771 = vmul.f32 %v1770, %v1549
        %v1772 = vmul.f32 %v1771, %v1770
        %v1773 = vmul.f32 0.5, %v1772
        %v1774 = vsub.f32 1.5, %v1773
        %v1775 = vmul.f32 %v1770, %v1774
        %v1776 = vmul.f32 %v1549, %v1775
        %vm1777 = vcmp.eq.f32.partialorder %v1549, inf
        %v1778 = vsel %vm1777, %v1549, %v1776
        %vm1779 = vcmp.eq.f32.partialorder %v1549, 0.0
        %v1780 = vand.u32 %v1549, 2147483648
        %v1781 = vsel %vm1779, %v1780, %v1778
        %v1782 = vrsqrt.pop %v1551
        %v1783 = vmul.f32 %v1782, %v1551
        %v1784 = vmul.f32 %v1783, %v1782
        %v1785 = vmul.f32 0.5, %v1784
        %v1786 = vsub.f32 1.5, %v1785
        %v1787 = vmul.f32 %v1782, %v1786
        %v1788 = vmul.f32 %v1551, %v1787
        %vm1789 = vcmp.eq.f32.partialorder %v1551, inf
        %v1790 = vsel %vm1789, %v1551, %v1788
        %vm1791 = vcmp.eq.f32.partialorder %v1551, 0.0
        %v1792 = vand.u32 %v1551, 2147483648
        %v1793 = vsel %vm1791, %v1792, %v1790
        %v1794 = vrsqrt.pop %v1553
        %v1795 = vmul.f32 %v1794, %v1553
        %v1796 = vmul.f32 %v1795, %v1794
        %v1797 = vmul.f32 0.5, %v1796
        %v1798 = vsub.f32 1.5, %v1797
        %v1799 = vmul.f32 %v1794, %v1798
        %v1800 = vmul.f32 %v1553, %v1799
        %vm1801 = vcmp.eq.f32.partialorder %v1553, inf
        %v1802 = vsel %vm1801, %v1553, %v1800
        %vm1803 = vcmp.eq.f32.partialorder %v1553, 0.0
        %v1804 = vand.u32 %v1553, 2147483648
        %v1805 = vsel %vm1803, %v1804, %v1802
        %v1806 = vrsqrt.pop %v1555
        %v1807 = vmul.f32 %v1806, %v1555
        %v1808 = vmul.f32 %v1807, %v1806
        %v1809 = vmul.f32 0.5, %v1808
        %v1810 = vsub.f32 1.5, %v1809
        %v1811 = vmul.f32 %v1806, %v1810
        %v1812 = vmul.f32 %v1555, %v1811
        %vm1813 = vcmp.eq.f32.partialorder %v1555, inf
        %v1814 = vsel %vm1813, %v1555, %v1812
        %vm1815 = vcmp.eq.f32.partialorder %v1555, 0.0
        %v1816 = vand.u32 %v1555, 2147483648
        %v1817 = vsel %vm1815, %v1816, %v1814
        %v1818 = vrsqrt.pop %v1557
        %v1819 = vmul.f32 %v1818, %v1557
        %v1820 = vmul.f32 %v1819, %v1818
        %v1821 = vmul.f32 0.5, %v1820
        %v1822 = vsub.f32 1.5, %v1821
        %v1823 = vmul.f32 %v1818, %v1822
        %v1824 = vmul.f32 %v1557, %v1823
        %vm1825 = vcmp.eq.f32.partialorder %v1557, inf
        %v1826 = vsel %vm1825, %v1557, %v1824
        %vm1827 = vcmp.eq.f32.partialorder %v1557, 0.0
        %v1828 = vand.u32 %v1557, 2147483648
        %v1829 = vsel %vm1827, %v1828, %v1826
        %v1830 = vadd.f32 %v1649, 1e-08
        %v1831 = vadd.f32 %v1661, 1e-08
        %v1832 = vadd.f32 %v1673, 1e-08
        %v1833 = vadd.f32 %v1685, 1e-08
        %v1834 = vadd.f32 %v1697, 1e-08
        %v1835 = vadd.f32 %v1709, 1e-08
        %v1836 = vadd.f32 %v1721, 1e-08
        %v1837 = vadd.f32 %v1733, 1e-08
        %v1838 = vadd.f32 %v1745, 1e-08
        %v1839 = vadd.f32 %v1757, 1e-08
        %v1840 = vadd.f32 %v1769, 1e-08
        %v1841 = vadd.f32 %v1781, 1e-08
        %v1842 = vadd.f32 %v1793, 1e-08
        %v1843 = vadd.f32 %v1805, 1e-08
        %v1844 = vadd.f32 %v1817, 1e-08
        %v1845 = vadd.f32 %v1829, 1e-08
        %v1846 = vrcp.pop %v1830
        %v1847 = vrcp.pop %v1831
        %v1848 = vrcp.pop %v1832
        %v1849 = vrcp.pop %v1833
        %v1850 = vrcp.pop %v1834
        %v1851 = vrcp.pop %v1835
        %v1852 = vrcp.pop %v1836
        %v1853 = vrcp.pop %v1837
        %v1854 = vrcp.pop %v1838
        %v1855 = vrcp.pop %v1839
        %v1856 = vrcp.pop %v1840
        %v1857 = vrcp.pop %v1841
        %v1858 = vrcp.pop %v1842
        %v1859 = vrcp.pop %v1843
        %v1860 = vrcp.pop %v1844
        %v1861 = vrcp.pop %v1845
        %v1862 = vadd.f32 %v1462, %v1846
        %v1863 = vadd.f32 %v1463, %v1847
        %v1864 = vadd.f32 %v1464, %v1848
        %v1865 = vadd.f32 %v1465, %v1849
        %v1866 = vadd.f32 %v1466, %v1850
        %v1867 = vadd.f32 %v1467, %v1851
        %v1868 = vadd.f32 %v1468, %v1852
        %v1869 = vadd.f32 %v1469, %v1853
        %v1870 = vadd.f32 %v1470, %v1854
        %v1871 = vadd.f32 %v1471, %v1855
        %v1872 = vadd.f32 %v1472, %v1856
        %v1873 = vadd.f32 %v1473, %v1857
        %v1874 = vadd.f32 %v1474, %v1858
        %v1875 = vadd.f32 %v1475, %v1859
        %v1876 = vadd.f32 %v1476, %v1860
        %v1877 = vadd.f32 %v1477, %v1861
        %v1878 = vsel %vm1622, %v1846, 0.0
        %v1879 = vsel %vm1623, %v1847, 0.0
        %v1880 = vsel %vm1624, %v1848, 0.0
        %v1881 = vsel %vm1625, %v1849, 0.0
        %v1882 = vsel %vm1626, %v1850, 0.0
        %v1883 = vsel %vm1627, %v1851, 0.0
        %v1884 = vsel %vm1628, %v1852, 0.0
        %v1885 = vsel %vm1629, %v1853, 0.0
        %v1886 = vsel %vm1630, %v1854, 0.0
        %v1887 = vsel %vm1631, %v1855, 0.0
        %v1888 = vsel %vm1632, %v1856, 0.0
        %v1889 = vsel %vm1633, %v1857, 0.0
        %v1890 = vsel %vm1634, %v1858, 0.0
        %v1891 = vsel %vm1635, %v1859, 0.0
        %v1892 = vsel %vm1636, %v1860, 0.0
        %v1893 = vsel %vm1637, %v1861, 0.0
        %v1894 = vadd.f32 %v1494, %v1878
        %v1895 = vadd.f32 %v1495, %v1879
        %v1896 = vadd.f32 %v1496, %v1880
        %v1897 = vadd.f32 %v1497, %v1881
        %v1898 = vadd.f32 %v1498, %v1882
        %v1899 = vadd.f32 %v1499, %v1883
        %v1900 = vadd.f32 %v1500, %v1884
        %v1901 = vadd.f32 %v1501, %v1885
        %v1902 = vadd.f32 %v1502, %v1886
        %v1903 = vadd.f32 %v1503, %v1887
        %v1904 = vadd.f32 %v1504, %v1888
        %v1905 = vadd.f32 %v1505, %v1889
        %v1906 = vadd.f32 %v1506, %v1890
        %v1907 = vadd.f32 %v1507, %v1891
        %v1908 = vadd.f32 %v1508, %v1892
        %v1909 = vadd.f32 %v1509, %v1893
        %v1910 = vrcp.pop %v1862
        %v1911 = vmul.f32 %v1862, %v1910
        %v1912 = vsub.f32 1.0, %v1911
        %v1913 = vmul.f32 %v1910, %v1912
        %v1914 = vadd.f32 %v1910, %v1913
        %vm1915 = vweird.f32 %v1862
        %vm1916 = vweird.f32 %v1910
        %vm1917 = vmor %vm1915, %vm1916
        %v1918 = vsel %vm1917, %v1910, %v1914
        %v1919 = vand.u32 2147483647, %v1862
        %vm1920 = vcmp.eq.f32.partialorder %v1919, 8.507059e+37
        %v1921 = vand.u32 %v1862, 2147483648
        %v1922 = vor.u32 1.1754944e-38, %v1921
        %v1923 = vsel %vm1920, %v1922, %v1918
        %v1924 = vmul.f32 1.0, %v1923
        %v1925 = vrcp.pop %v1863
        %v1926 = vmul.f32 %v1863, %v1925
        %v1927 = vsub.f32 1.0, %v1926
        %v1928 = vmul.f32 %v1925, %v1927
        %v1929 = vadd.f32 %v1925, %v1928
        %vm1930 = vweird.f32 %v1863
        %vm1931 = vweird.f32 %v1925
        %vm1932 = vmor %vm1930, %vm1931
        %v1933 = vsel %vm1932, %v1925, %v1929
        %v1934 = vand.u32 2147483647, %v1863
        %vm1935 = vcmp.eq.f32.partialorder %v1934, 8.507059e+37
        %v1936 = vand.u32 %v1863, 2147483648
        %v1937 = vor.u32 1.1754944e-38, %v1936
        %v1938 = vsel %vm1935, %v1937, %v1933
        %v1939 = vmul.f32 1.0, %v1938
        %v1940 = vrcp.pop %v1864
        %v1941 = vmul.f32 %v1864, %v1940
        %v1942 = vsub.f32 1.0, %v1941
        %v1943 = vmul.f32 %v1940, %v1942
        %v1944 = vadd.f32 %v1940, %v1943
        %vm1945 = vweird.f32 %v1864
        %vm1946 = vweird.f32 %v1940
        %vm1947 = vmor %vm1945, %vm1946
        %v1948 = vsel %vm1947, %v1940, %v1944
        %v1949 = vand.u32 2147483647, %v1864
        %vm1950 = vcmp.eq.f32.partialorder %v1949, 8.507059e+37
        %v1951 = vand.u32 %v1864, 2147483648
        %v1952 = vor.u32 1.1754944e-38, %v1951
        %v1953 = vsel %vm1950, %v1952, %v1948
        %v1954 = vmul.f32 1.0, %v1953
        %v1955 = vrcp.pop %v1865
        %v1956 = vmul.f32 %v1865, %v1955
        %v1957 = vsub.f32 1.0, %v1956
        %v1958 = vmul.f32 %v1955, %v1957
        %v1959 = vadd.f32 %v1955, %v1958
        %vm1960 = vweird.f32 %v1865
        %vm1961 = vweird.f32 %v1955
        %vm1962 = vmor %vm1960, %vm1961
        %v1963 = vsel %vm1962, %v1955, %v1959
        %v1964 = vand.u32 2147483647, %v1865
        %vm1965 = vcmp.eq.f32.partialorder %v1964, 8.507059e+37
        %v1966 = vand.u32 %v1865, 2147483648
        %v1967 = vor.u32 1.1754944e-38, %v1966
        %v1968 = vsel %vm1965, %v1967, %v1963
        %v1969 = vmul.f32 1.0, %v1968
        %v1970 = vrcp.pop %v1866
        %v1971 = vmul.f32 %v1866, %v1970
        %v1972 = vsub.f32 1.0, %v1971
        %v1973 = vmul.f32 %v1970, %v1972
        %v1974 = vadd.f32 %v1970, %v1973
        %vm1975 = vweird.f32 %v1866
        %vm1976 = vweird.f32 %v1970
        %vm1977 = vmor %vm1975, %vm1976
        %v1978 = vsel %vm1977, %v1970, %v1974
        %v1979 = vand.u32 2147483647, %v1866
        %vm1980 = vcmp.eq.f32.partialorder %v1979, 8.507059e+37
        %v1981 = vand.u32 %v1866, 2147483648
        %v1982 = vor.u32 1.1754944e-38, %v1981
        %v1983 = vsel %vm1980, %v1982, %v1978
        %v1984 = vmul.f32 1.0, %v1983
        %v1985 = vrcp.pop %v1867
        %v1986 = vmul.f32 %v1867, %v1985
        %v1987 = vsub.f32 1.0, %v1986
        %v1988 = vmul.f32 %v1985, %v1987
        %v1989 = vadd.f32 %v1985, %v1988
        %vm1990 = vweird.f32 %v1867
        %vm1991 = vweird.f32 %v1985
        %vm1992 = vmor %vm1990, %vm1991
        %v1993 = vsel %vm1992, %v1985, %v1989
        %v1994 = vand.u32 2147483647, %v1867
        %vm1995 = vcmp.eq.f32.partialorder %v1994, 8.507059e+37
        %v1996 = vand.u32 %v1867, 2147483648
        %v1997 = vor.u32 1.1754944e-38, %v1996
        %v1998 = vsel %vm1995, %v1997, %v1993
        %v1999 = vmul.f32 1.0, %v1998
        %v2000 = vrcp.pop %v1868
        %v2001 = vmul.f32 %v1868, %v2000
        %v2002 = vsub.f32 1.0, %v2001
        %v2003 = vmul.f32 %v2000, %v2002
        %v2004 = vadd.f32 %v2000, %v2003
        %vm2005 = vweird.f32 %v1868
        %vm2006 = vweird.f32 %v2000
        %vm2007 = vmor %vm2005, %vm2006
        %v2008 = vsel %vm2007, %v2000, %v2004
        %v2009 = vand.u32 2147483647, %v1868
        %vm2010 = vcmp.eq.f32.partialorder %v2009, 8.507059e+37
        %v2011 = vand.u32 %v1868, 2147483648
        %v2012 = vor.u32 1.1754944e-38, %v2011
        %v2013 = vsel %vm2010, %v2012, %v2008
        %v2014 = vmul.f32 1.0, %v2013
        %v2015 = vrcp.pop %v1869
        %v2016 = vmul.f32 %v1869, %v2015
        %v2017 = vsub.f32 1.0, %v2016
        %v2018 = vmul.f32 %v2015, %v2017
        %v2019 = vadd.f32 %v2015, %v2018
        %vm2020 = vweird.f32 %v1869
        %vm2021 = vweird.f32 %v2015
        %vm2022 = vmor %vm2020, %vm2021
        %v2023 = vsel %vm2022, %v2015, %v2019
        %v2024 = vand.u32 2147483647, %v1869
        %vm2025 = vcmp.eq.f32.partialorder %v2024, 8.507059e+37
        %v2026 = vand.u32 %v1869, 2147483648
        %v2027 = vor.u32 1.1754944e-38, %v2026
        %v2028 = vsel %vm2025, %v2027, %v2023
        %v2029 = vmul.f32 1.0, %v2028
        %v2030 = vrcp.pop %v1870
        %v2031 = vmul.f32 %v1870, %v2030
        %v2032 = vsub.f32 1.0, %v2031
        %v2033 = vmul.f32 %v2030, %v2032
        %v2034 = vadd.f32 %v2030, %v2033
        %vm2035 = vweird.f32 %v1870
        %vm2036 = vweird.f32 %v2030
        %vm2037 = vmor %vm2035, %vm2036
        %v2038 = vsel %vm2037, %v2030, %v2034
        %v2039 = vand.u32 2147483647, %v1870
        %vm2040 = vcmp.eq.f32.partialorder %v2039, 8.507059e+37
        %v2041 = vand.u32 %v1870, 2147483648
        %v2042 = vor.u32 1.1754944e-38, %v2041
        %v2043 = vsel %vm2040, %v2042, %v2038
        %v2044 = vmul.f32 1.0, %v2043
        %v2045 = vrcp.pop %v1871
        %v2046 = vmul.f32 %v1871, %v2045
        %v2047 = vsub.f32 1.0, %v2046
        %v2048 = vmul.f32 %v2045, %v2047
        %v2049 = vadd.f32 %v2045, %v2048
        %vm2050 = vweird.f32 %v1871
        %vm2051 = vweird.f32 %v2045
        %vm2052 = vmor %vm2050, %vm2051
        %v2053 = vsel %vm2052, %v2045, %v2049
        %v2054 = vand.u32 2147483647, %v1871
        %vm2055 = vcmp.eq.f32.partialorder %v2054, 8.507059e+37
        %v2056 = vand.u32 %v1871, 2147483648
        %v2057 = vor.u32 1.1754944e-38, %v2056
        %v2058 = vsel %vm2055, %v2057, %v2053
        %v2059 = vmul.f32 1.0, %v2058
        %v2060 = vrcp.pop %v1872
        %v2061 = vmul.f32 %v1872, %v2060
        %v2062 = vsub.f32 1.0, %v2061
        %v2063 = vmul.f32 %v2060, %v2062
        %v2064 = vadd.f32 %v2060, %v2063
        %vm2065 = vweird.f32 %v1872
        %vm2066 = vweird.f32 %v2060
        %vm2067 = vmor %vm2065, %vm2066
        %v2068 = vsel %vm2067, %v2060, %v2064
        %v2069 = vand.u32 2147483647, %v1872
        %vm2070 = vcmp.eq.f32.partialorder %v2069, 8.507059e+37
        %v2071 = vand.u32 %v1872, 2147483648
        %v2072 = vor.u32 1.1754944e-38, %v2071
        %v2073 = vsel %vm2070, %v2072, %v2068
        %v2074 = vmul.f32 1.0, %v2073
        %v2075 = vrcp.pop %v1873
        %v2076 = vmul.f32 %v1873, %v2075
        %v2077 = vsub.f32 1.0, %v2076
        %v2078 = vmul.f32 %v2075, %v2077
        %v2079 = vadd.f32 %v2075, %v2078
        %vm2080 = vweird.f32 %v1873
        %vm2081 = vweird.f32 %v2075
        %vm2082 = vmor %vm2080, %vm2081
        %v2083 = vsel %vm2082, %v2075, %v2079
        %v2084 = vand.u32 2147483647, %v1873
        %vm2085 = vcmp.eq.f32.partialorder %v2084, 8.507059e+37
        %v2086 = vand.u32 %v1873, 2147483648
        %v2087 = vor.u32 1.1754944e-38, %v2086
        %v2088 = vsel %vm2085, %v2087, %v2083
        %v2089 = vmul.f32 1.0, %v2088
        %v2090 = vrcp.pop %v1874
        %v2091 = vmul.f32 %v1874, %v2090
        %v2092 = vsub.f32 1.0, %v2091
        %v2093 = vmul.f32 %v2090, %v2092
        %v2094 = vadd.f32 %v2090, %v2093
        %vm2095 = vweird.f32 %v1874
        %vm2096 = vweird.f32 %v2090
        %vm2097 = vmor %vm2095, %vm2096
        %v2098 = vsel %vm2097, %v2090, %v2094
        %v2099 = vand.u32 2147483647, %v1874
        %vm2100 = vcmp.eq.f32.partialorder %v2099, 8.507059e+37
        %v2101 = vand.u32 %v1874, 2147483648
        %v2102 = vor.u32 1.1754944e-38, %v2101
        %v2103 = vsel %vm2100, %v2102, %v2098
        %v2104 = vmul.f32 1.0, %v2103
        %v2105 = vrcp.pop %v1875
        %v2106 = vmul.f32 %v1875, %v2105
        %v2107 = vsub.f32 1.0, %v2106
        %v2108 = vmul.f32 %v2105, %v2107
        %v2109 = vadd.f32 %v2105, %v2108
        %vm2110 = vweird.f32 %v1875
        %vm2111 = vweird.f32 %v2105
        %vm2112 = vmor %vm2110, %vm2111
        %v2113 = vsel %vm2112, %v2105, %v2109
        %v2114 = vand.u32 2147483647, %v1875
        %vm2115 = vcmp.eq.f32.partialorder %v2114, 8.507059e+37
        %v2116 = vand.u32 %v1875, 2147483648
        %v2117 = vor.u32 1.1754944e-38, %v2116
        %v2118 = vsel %vm2115, %v2117, %v2113
        %v2119 = vmul.f32 1.0, %v2118
        %v2120 = vrcp.pop %v1876
        %v2121 = vmul.f32 %v1876, %v2120
        %v2122 = vsub.f32 1.0, %v2121
        %v2123 = vmul.f32 %v2120, %v2122
        %v2124 = vadd.f32 %v2120, %v2123
        %vm2125 = vweird.f32 %v1876
        %vm2126 = vweird.f32 %v2120
        %vm2127 = vmor %vm2125, %vm2126
        %v2128 = vsel %vm2127, %v2120, %v2124
        %v2129 = vand.u32 2147483647, %v1876
        %vm2130 = vcmp.eq.f32.partialorder %v2129, 8.507059e+37
        %v2131 = vand.u32 %v1876, 2147483648
        %v2132 = vor.u32 1.1754944e-38, %v2131
        %v2133 = vsel %vm2130, %v2132, %v2128
        %v2134 = vmul.f32 1.0, %v2133
        %v2135 = vrcp.pop %v1877
        %v2136 = vmul.f32 %v1877, %v2135
        %v2137 = vsub.f32 1.0, %v2136
        %v2138 = vmul.f32 %v2135, %v2137
        %v2139 = vadd.f32 %v2135, %v2138
        %vm2140 = vweird.f32 %v1877
        %vm2141 = vweird.f32 %v2135
        %vm2142 = vmor %vm2140, %vm2141
        %v2143 = vsel %vm2142, %v2135, %v2139
        %v2144 = vand.u32 2147483647, %v1877
        %vm2145 = vcmp.eq.f32.partialorder %v2144, 8.507059e+37
        %v2146 = vand.u32 %v1877, 2147483648
        %v2147 = vor.u32 1.1754944e-38, %v2146
        %v2148 = vsel %vm2145, %v2147, %v2143
        %v2149 = vmul.f32 1.0, %v2148
        %v2150 = vmul.f32 %v1894, %v1924
        %v2151 = vmul.f32 %v1895, %v1939
        %v2152 = vmul.f32 %v1896, %v1954
        %v2153 = vmul.f32 %v1897, %v1969
        %v2154 = vmul.f32 %v1898, %v1984
        %v2155 = vmul.f32 %v1899, %v1999
        %v2156 = vmul.f32 %v1900, %v2014
        %v2157 = vmul.f32 %v1901, %v2029
        %v2158 = vmul.f32 %v1902, %v2044
        %v2159 = vmul.f32 %v1903, %v2059
        %v2160 = vmul.f32 %v1904, %v2074
        %v2161 = vmul.f32 %v1905, %v2089
        %v2162 = vmul.f32 %v1906, %v2104
        %v2163 = vmul.f32 %v1907, %v2119
        %v2164 = vmul.f32 %v1908, %v2134
        %v2165 = vmul.f32 %v1909, %v2149
        %v2166 = vpack.c.bf16 %v516, %v515
        %v2167 = vpack.c.bf16 %v2151, %v2150
        %v2168 = vpack.c.bf16 %v2153, %v2152
        %v2169 = vpack.c.bf16 %v2155, %v2154
        %v2170 = vpack.c.bf16 %v2157, %v2156
        %v2171 = vpack.c.bf16 %v2159, %v2158
        %v2172 = vpack.c.bf16 %v2161, %v2160
        %v2173 = vpack.c.bf16 %v2163, %v2162
        %v2174 = vpack.c.bf16 %v2165, %v2164
        %2175 = vmatpush.bf16.xpose.msra.mxu0 %v2174
        %2176 = vmatpush.bf16.xpose.msra.mxu0 %v2173
        %2177 = vmatpush.bf16.xpose.msra.mxu0 %v2172
        %2178 = vmatpush.bf16.xpose.msra.mxu0 %v2171
        %2179 = vmatpush.bf16.xpose.msra.mxu0 %v2170
        %2180 = vmatpush.bf16.xpose.msra.mxu0 %v2169
        %2181 = vmatpush.bf16.xpose.msra.mxu0 %v2168
        %2182 = vmatpush.bf16.xpose.msra.mxu0 %v2167
        %2183 = vmatmul.bf16.gmra.mxu0 %v2166
        %v2184 = vpop.f32.mrf.mxu0
        %v2185 = vadd.f32 0.0, %v2184
        %v2186 = vpop.f32.mrf.mxu0
        %v2187 = vadd.f32 0.0, %v2186
        %2188 = vdwg.mxu0
        %v2189 = vadd.f32 %v575, %v2185
        %v2190 = vadd.f32 %v576, %v2187
        %2191 = vst [vmem:[%s426] sm:$0xff] %v2189
        %2192 = vst [vmem:[%s426 + $0x8] sm:$0xff] %v2190
        %s2193 = sand.u32 %s280, 1
        %s2194 = scalar_lea.sflag [#allocation3], %s2193
        %s2195 = sand.u32 %s280, 1
        %s2196 = smul.addr %s2195, 16
        %s2197 = scalar_lea.vmem [#allocation2], %s2196
        // Predicated region
        $region61: #{tpu_custom_call.1} parent=59 // pred_check
          %p2198 = pneg %p290
        $region62: #{tpu_custom_call.1} parent=59 // pred_check_branch
          %2200 = sbr.rel (%p2198) target = $region64
        $region63: #{tpu_custom_call.1} parent=59 // pred_region
          %2202 = vsyncadd %s2194, 0
          %s2203 = smul.addr %s28, 2
          %s2204 = sadd.s32 %s29, %s2203
          %s2205 = smul.addr %s2204, 8
          %s2206 = scalar_lea.hbm %s10, %s2205
          %s2207 = sshll.u32 %s2197, 4
          %s2208 = int_to_ptr.vmem [resolvable:$true] %s2207
          %s2209 = sshll.u32 %s2206, 4
          %s2210 = int_to_ptr.hbm [resolvable:$true] %s2209
          %2215 = dma.vmem_to_hbm [thread:$0]  %s2208, 256, %s2210, %s2194, 128, 128, 8
        $region64: #{tpu_custom_call.1} parent=59 // pred_fallthru
          _
      $region60: #{tpu_custom_call.1} parent=5 // pred_fallthru
        _
      %p2216 = scmp.le.s32.totalorder 2, %s19
      // Predicated region
      $region65: #{tpu_custom_call.1} parent=5 // pred_check
        %p2217 = pneg %p2216
      $region66: #{tpu_custom_call.1} parent=5 // pred_check_branch
        %2219 = sbr.rel (%p2217) target = $region68
      $region67: #{tpu_custom_call.1} parent=5 // pred_region
        %s2220 = ssub.s32 %s19, 2
        // Predicated region
        $region69: #{tpu_custom_call.1} parent=67 // pred_check
          %p2221 = pneg %p296
        $region70: #{tpu_custom_call.1} parent=67 // pred_check_branch
          %2223 = sbr.rel (%p2221) target = $region72
        $region71: #{tpu_custom_call.1} parent=67 // pred_region
          %s2224 = sand.u32 %s281, 1
          %s2225 = scalar_lea.sflag [#allocation3], %s2224
          %s2226 = sand.u32 %s281, 1
          %s2227 = smul.addr %s2226, 16
          %s2228 = scalar_lea.vmem [#allocation2], %s2227
          %2230 = dma.done %s2225, 256
        $region72: #{tpu_custom_call.1} parent=67 // pred_fallthru
          _
      $region68: #{tpu_custom_call.1} parent=5 // pred_fallthru
        _
    $region6: #{tpu_custom_call.1} parent=1 // loop_footer
      %s23 = sadd.s32 1, %s19
    $region7: #{tpu_custom_call.1} parent=1 // loop_footer_branch
      %18 = sbr.rel target = $region3
    $region8: #{tpu_custom_call.1} parent=1 // loop_exit
      _
    %2231 = vsyncpa [#allocation3], 1
    %s2232 = scalar_lea.sflag [#allocation3], 1
    %2233 = vsyncpa %s2232, 1

</llo_original>
